<compile_context>
chip_gen: v5e
topology: v5e:2x2
jax: 0.10.0
libtpu: 0.0.40
codegen_flags: <defaults>
</compile_context>

<pallas_src>
import jax
import jax.numpy as jnp
from jax.experimental import pallas as pl
from jax.experimental.pallas import tpu as pltpu

VMEM = pl.BlockSpec(memory_space=pltpu.MemorySpace.VMEM)


def _round_up(x, m):
    return (x + m - 1) // m * m


def _const_spec(shape):
    n = len(shape)
    return pl.BlockSpec(shape, lambda t: (0,) * n)


def _lstm_gates(gates, c, H):
    """gates (B, 4H) f32 in PyTorch order [i, f, g, o]; c (B, H) f32."""
    i = jax.nn.sigmoid(gates[:, 0 * H:1 * H])
    f = jax.nn.sigmoid(gates[:, 1 * H:2 * H])
    g = jnp.tanh(gates[:, 2 * H:3 * H])
    o = jax.nn.sigmoid(gates[:, 3 * H:4 * H])
    c_new = f * c + i * g
    h_new = o * jnp.tanh(c_new)
    return h_new, c_new


# ---------------------------------------------------------------------------
# Encoder: full bidirectional recurrence in one kernel, directions interleaved
# ---------------------------------------------------------------------------
def _encoder_kernel(emb_ref, wihf_ref, whhf_ref, bf_ref,
                    wihb_ref, whhb_ref, bb_ref, fcw_ref, fcb_ref,
                    enc_ref, hid_ref, cell_ref):
    S, B, _ = emb_ref.shape
    H = hid_ref.shape[-1]

    wihf = wihf_ref[...]          # (E, 4H) bf16
    whhf = whhf_ref[...]          # (H, 4H) bf16
    bf = bf_ref[...]              # (1, 4H) f32
    wihb = wihb_ref[...]
    whhb = whhb_ref[...]
    bb = bb_ref[...]
    z = jnp.zeros((B, H), jnp.float32)

    def body(t, carry):
        hf, cf, hb, cb = carry
        tb = S - 1 - t
        # two independent recurrent chains per iteration (fwd at t, bwd at S-1-t)
        gf = (jnp.dot(emb_ref[t], wihf, preferred_element_type=jnp.float32)
              + jnp.dot(hf.astype(jnp.bfloat16), whhf, preferred_element_type=jnp.float32)
              + bf)
        gb = (jnp.dot(emb_ref[tb], wihb, preferred_element_type=jnp.float32)
              + jnp.dot(hb.astype(jnp.bfloat16), whhb, preferred_element_type=jnp.float32)
              + bb)
        hf, cf = _lstm_gates(gf, cf, H)
        hb, cb = _lstm_gates(gb, cb, H)
        # write directly into the fused bf16 encoder-state tensor (no wrapper concat/cast)
        enc_ref[t, :, :H] = hf.astype(jnp.bfloat16)
        enc_ref[tb, :, H:] = hb.astype(jnp.bfloat16)
        return hf, cf, hb, cb

    hf, cf, hb, cb = jax.lax.fori_loop(0, S, body, (z, z, z, z))

    fcw = fcw_ref[...]            # (2H, H) bf16
    fcb = fcb_ref[...]            # (1, H)  f32
    hid_ref[...] = (jnp.dot(hf.astype(jnp.bfloat16), fcw[:H], preferred_element_type=jnp.float32)
                    + jnp.dot(hb.astype(jnp.bfloat16), fcw[H:], preferred_element_type=jnp.float32)
                    + fcb)
    # reference bug preserved: fc_hidden reused for the cell projection
    cell_ref[...] = (jnp.dot(cf.astype(jnp.bfloat16), fcw[:H], preferred_element_type=jnp.float32)
                     + jnp.dot(cb.astype(jnp.bfloat16), fcw[H:], preferred_element_type=jnp.float32)
                     + fcb)


def encoder_forward(p, source_pad):
    S, Bp = source_pad.shape
    H = p['enc_whh_f'].shape[0]
    emb = jnp.take(p['E_enc'], source_pad, axis=0).astype(jnp.bfloat16)      # (S, Bp, E)

    enc, hid, cell = pl.pallas_call(
        _encoder_kernel,
        out_shape=(jax.ShapeDtypeStruct((S, Bp, 2 * H), jnp.bfloat16),
                   jax.ShapeDtypeStruct((Bp, H), jnp.float32),
                   jax.ShapeDtypeStruct((Bp, H), jnp.float32)),
        in_specs=[VMEM] * 9,
        out_specs=(VMEM, VMEM, VMEM),
        compiler_params=pltpu.CompilerParams(vmem_limit_bytes=48 * 1024 * 1024),
    )(emb,
      p['enc_wih_f'].astype(jnp.bfloat16), p['enc_whh_f'].astype(jnp.bfloat16), p['enc_b_f'],
      p['enc_wih_b'].astype(jnp.bfloat16), p['enc_whh_b'].astype(jnp.bfloat16), p['enc_b_b'],
      p['fc_hidden_w'].astype(jnp.bfloat16), p['fc_hidden_b'])
    return enc, hid, cell


# ---------------------------------------------------------------------------
# Decoder: attention + LSTM recurrence streamed over a grid of time chunks
# ---------------------------------------------------------------------------
def _decoder_kernel(emb_ref, enc_ref, spart_ref, wh_ref,
                    wctx_ref, wemb_ref, whh_ref, b_ref, wfc_ref, bfc_ref,
                    h0_ref, c0_ref, out_ref, h_sc, c_sc, hs_sc):
    TC, B, _ = emb_ref.shape
    S = enc_ref.shape[1]
    twoH = enc_ref.shape[-1]
    H = h0_ref.shape[-1]
    Vp = out_ref.shape[-1]

    @pl.when(pl.program_id(0) == 0)
    def _():
        h_sc[...] = h0_ref[...]
        c_sc[...] = c0_ref[...]

    enc = enc_ref[...]            # (B, S, 2H) bf16, VMEM-resident across grid steps
    s_part = spart_ref[...]       # (B, S) f32: encoder part of the energy (+ bias), hoisted
    w_h = wh_ref[...]             # (1, H)  f32
    wctx = wctx_ref[...]          # (2H, 4H) bf16
    wemb = wemb_ref[...]          # (E, 4H)  bf16
    whh = whh_ref[...]            # (H, 4H)  bf16
    b = b_ref[...]                # (1, 4H)  f32

    def step(t, carry):
        h, c = carry                                                    # (B, H) f32
        # attention: ReLU energy + softmax over source positions
        h_part = jnp.sum(h * w_h, axis=-1, keepdims=True)               # (B, 1)
        energy = jnp.maximum(s_part + h_part, 0.0)                      # (B, S)
        m = jnp.max(energy, axis=-1, keepdims=True)
        e = jnp.exp(energy - m)
        attn = e * pl.reciprocal(jnp.sum(e, axis=-1, keepdims=True), approx=True)
        # context on the MXU: (B,1,S) @ (B,S,2H) -> (B,1,2H), f32 accumulation
        ctx = jnp.einsum('bqs,bsd->bqd',
                         attn.astype(jnp.bfloat16).reshape(B, 1, S), enc,
                         preferred_element_type=jnp.float32).reshape(B, twoH)

        # gates = ctx@W_ctx + emb@W_emb + h@W_hh + b  (no lane-axis concatenates)
        gates = (jnp.dot(ctx.astype(jnp.bfloat16), wctx, preferred_element_type=jnp.float32)
                 + jnp.dot(emb_ref[t], wemb, preferred_element_type=jnp.float32)
                 + jnp.dot(h.astype(jnp.bfloat16), whh, preferred_element_type=jnp.float32)
                 + b)
        h_new, c_new = _lstm_gates(gates, c, H)
        hs_sc[t] = h_new.astype(jnp.bfloat16)
        return h_new, c_new

    h_fin, c_fin = jax.lax.fori_loop(0, TC, step, (h_sc[...], c_sc[...]))
    h_sc[...] = h_fin
    c_sc[...] = c_fin

    # vocab projection hoisted out of the recurrence: one (TC*B, H) x (H, Vp) matmul
    hs = hs_sc[...].reshape(TC * B, H)
    logits = jnp.dot(hs, wfc_ref[...], preferred_element_type=jnp.float32) + bfc_ref[...]
    out_ref[...] = logits.reshape(TC, B, Vp).astype(out_ref.dtype)


def decoder_forward(p, dec_tokens_pad, enc_bsh, s_part, hidden, cell, V, TC):
    T_pad, Bp = dec_tokens_pad.shape
    H = hidden.shape[-1]
    S = enc_bsh.shape[1]
    twoH = enc_bsh.shape[-1]
    E = p['E_dec'].shape[-1]
    Vp = _round_up(V, 128)
    n_chunks = T_pad // TC

    emb = jnp.take(p['E_dec'], dec_tokens_pad, axis=0).astype(jnp.bfloat16)   # (T_pad, Bp, E)
    w_h = p['dec_we'][:, :H]                                                  # (1, H) f32
    wctx = p['dec_wih_ctx'].astype(jnp.bfloat16)
    wemb = p['dec_wih_emb'].astype(jnp.bfloat16)
    whh = p['dec_whh'].astype(jnp.bfloat16)
    wfc = jnp.zeros((H, Vp), jnp.float32).at[:, :V].set(p['dec_wfc']).astype(jnp.bfloat16)
    bfc = jnp.zeros((1, Vp), jnp.float32).at[:, :V].set(p['dec_bfc'])

    preds = pl.pallas_call(
        _decoder_kernel,
        grid=(n_chunks,),
        out_shape=jax.ShapeDtypeStruct((T_pad, Bp, Vp), jnp.bfloat16),
        in_specs=[
            pl.BlockSpec((TC, Bp, E), lambda t: (t, 0, 0)),   # decoder-input embeddings (streamed)
            _const_spec((Bp, S, twoH)),                       # encoder states (resident)
            _const_spec((Bp, S)),                             # hoisted energy part (resident)
            _const_spec((1, H)),                              # energy weight, hidden part
            _const_spec((twoH, 4 * H)),                       # W_ih (context rows)
            _const_spec((E, 4 * H)),                          # W_ih (embedding rows)
            _const_spec((H, 4 * H)),                          # W_hh
            _const_spec((1, 4 * H)),                          # LSTM bias
            _const_spec((H, Vp)),                             # fc weight
            _const_spec((1, Vp)),                             # fc bias
            _const_spec((Bp, H)),                             # h0
            _const_spec((Bp, H)),                             # c0
        ],
        out_specs=pl.BlockSpec((TC, Bp, Vp), lambda t: (t, 0, 0)),
        scratch_shapes=[pltpu.VMEM((Bp, H), jnp.float32),       # h carried across chunks
                        pltpu.VMEM((Bp, H), jnp.float32),       # c carried across chunks
                        pltpu.VMEM((TC, Bp, H), jnp.bfloat16)], # staged hidden states
        compiler_params=pltpu.CompilerParams(
            dimension_semantics=("arbitrary",),
            vmem_limit_bytes=48 * 1024 * 1024),
    )(emb, enc_bsh, s_part, w_h, wctx, wemb, whh, p['dec_b'], wfc, bfc,
      hidden, cell)
    return preds


# ---------------------------------------------------------------------------
# Model forward
# ---------------------------------------------------------------------------
def seq2seq_forward(p, source, target, time_chunk=4):
    S, B = source.shape
    T = target.shape[0]
    V = p['dec_wfc'].shape[1]
    H = p['dec_whh'].shape[0]
    Bp = _round_up(max(B, 8), 8)
    TC = time_chunk
    T_pad = _round_up(T, TC)

    src_pad = jnp.zeros((S, Bp), source.dtype).at[:, :B].set(source)
    # reference semantics with teacher forcing always taken:
    # decoder inputs = [target[0], target[0], target[1], ..., target[T-2]]
    dec_in = jnp.concatenate([target[:1], target[:T - 1]], axis=0)
    dec_in_pad = jnp.zeros((T_pad, Bp), target.dtype).at[:T, :B].set(dec_in)

    enc, hidden, cell = encoder_forward(p, src_pad)          # enc: (S, Bp, 2H) bf16

    # decoder-ready layout + loop-invariant encoder part of the attention energy (+ bias)
    enc_bsh = jnp.transpose(enc, (1, 0, 2))                  # (Bp, S, 2H) bf16
    w_enc = p['dec_we'][0, H:].astype(jnp.bfloat16)          # (2H,)
    s_part = (jnp.einsum('bsh,h->bs', enc_bsh, w_enc, preferred_element_type=jnp.float32)
              + p['dec_be'][0, 0])

    preds = decoder_forward(p, dec_in_pad, enc_bsh, s_part, hidden, cell, V, TC)
    # strip time / batch / vocab padding; logits are bf16 (f32 accumulation in-kernel)
    return preds[:T, :B, :V]


# ---------------------------------------------------------------------------
# Deterministic parameter construction + demo
# ---------------------------------------------------------------------------
def init_params(key, V_en, V_de, E, H):
    names_shapes = [
        ('E_enc',       (V_en, E)),
        ('E_dec',       (V_de, E)),
        ('enc_wih_f',   (E, 4 * H)),
        ('enc_whh_f',   (H, 4 * H)),
        ('enc_b_f',     (1, 4 * H)),
        ('enc_wih_b',   (E, 4 * H)),
        ('enc_whh_b',   (H, 4 * H)),
        ('enc_b_b',     (1, 4 * H)),
        ('fc_hidden_w', (2 * H, H)),
        ('fc_hidden_b', (1, H)),
        ('dec_we',      (1, 3 * H)),
        ('dec_be',      (1, 1)),
        ('dec_wih_ctx', (2 * H, 4 * H)),
        ('dec_wih_emb', (E, 4 * H)),
        ('dec_whh',     (H, 4 * H)),
        ('dec_b',       (1, 4 * H)),
        ('dec_wfc',     (H, V_de)),
        ('dec_bfc',     (1, V_de)),
    ]
    keys = jax.random.split(key, len(names_shapes))
    return {name: 0.1 * jax.random.normal(k, shape, jnp.float32)
            for k, (name, shape) in zip(keys, names_shapes)}


if __name__ == "__main__":
    # small shapes consistent with the module's forward
    V_en, V_de = 40, 48          # source / target vocab sizes
    E, H = 16, 32                # embedding dim / hidden dim
    S_src, S_tgt, B = 8, 6, 2    # source len / target len / batch

    root = jax.random.PRNGKey(0)
    k_p, k_s, k_t = jax.random.split(root, 3)
    params = init_params(k_p, V_en, V_de, E, H)

    source = jax.random.randint(k_s, (S_src, B), 0, V_en, dtype=jnp.int32)
    target = jax.random.randint(k_t, (S_tgt, B), 0, V_de, dtype=jnp.int32)

    outputs = jax.jit(seq2seq_forward)(params, source, target)
    outputs = jax.block_until_ready(outputs)

    assert outputs.shape == (S_tgt, B, V_de), outputs.shape
    assert bool(jnp.all(jnp.isfinite(outputs.astype(jnp.float32))))
    print("KERNEL_OK")
</pallas_src>

<mosaic_0001>
module attributes {stable_mosaic.version = 11 : i64} {
  func.func @_encoder_kernel(%arg0: memref<8x8x16xbf16, #tpu.memory_space<vmem>>, %arg1: memref<16x128xbf16, #tpu.memory_space<vmem>>, %arg2: memref<32x128xbf16, #tpu.memory_space<vmem>>, %arg3: memref<1x128xf32, #tpu.memory_space<vmem>>, %arg4: memref<16x128xbf16, #tpu.memory_space<vmem>>, %arg5: memref<32x128xbf16, #tpu.memory_space<vmem>>, %arg6: memref<1x128xf32, #tpu.memory_space<vmem>>, %arg7: memref<64x32xbf16, #tpu.memory_space<vmem>>, %arg8: memref<1x32xf32, #tpu.memory_space<vmem>>, %arg9: memref<8x8x64xbf16, #tpu.memory_space<vmem>>, %arg10: memref<8x32xf32, #tpu.memory_space<vmem>>, %arg11: memref<8x32xf32, #tpu.memory_space<vmem>>) attributes {dimension_semantics = [], scalar_prefetch = 0 : i64, scratch_operands = 0 : i64, tpu.core_type = #tpu.core_type<tc>} {
    %c0 = arith.constant 0 : index
    %c0_0 = arith.constant 0 : index
    %0 = vector.load %arg1[%c0, %c0_0] : memref<16x128xbf16, #tpu.memory_space<vmem>>, vector<16x128xbf16>
    %c0_1 = arith.constant 0 : index
    %c0_2 = arith.constant 0 : index
    %1 = vector.load %arg2[%c0_1, %c0_2] : memref<32x128xbf16, #tpu.memory_space<vmem>>, vector<32x128xbf16>
    %c0_3 = arith.constant 0 : index
    %c0_4 = arith.constant 0 : index
    %2 = vector.load %arg3[%c0_3, %c0_4] : memref<1x128xf32, #tpu.memory_space<vmem>>, vector<1x128xf32>
    %c0_5 = arith.constant 0 : index
    %c0_6 = arith.constant 0 : index
    %3 = vector.load %arg4[%c0_5, %c0_6] : memref<16x128xbf16, #tpu.memory_space<vmem>>, vector<16x128xbf16>
    %c0_7 = arith.constant 0 : index
    %c0_8 = arith.constant 0 : index
    %4 = vector.load %arg5[%c0_7, %c0_8] : memref<32x128xbf16, #tpu.memory_space<vmem>>, vector<32x128xbf16>
    %c0_9 = arith.constant 0 : index
    %c0_10 = arith.constant 0 : index
    %5 = vector.load %arg6[%c0_9, %c0_10] : memref<1x128xf32, #tpu.memory_space<vmem>>, vector<1x128xf32>
    %cst = arith.constant 0.000000e+00 : f32
    %6 = vector.broadcast %cst : f32 to vector<8x32xf32>
    %c0_i32 = arith.constant 0 : i32
    %c8_i32 = arith.constant 8 : i32
    %7 = arith.addi %c0_i32, %c8_i32 : i32
    %c1_i32 = arith.constant 1 : i32
    %8:4 = scf.for %arg12 = %c0_i32 to %7 step %c1_i32 iter_args(%arg13 = %6, %arg14 = %6, %arg15 = %6, %arg16 = %6) -> (vector<8x32xf32>, vector<8x32xf32>, vector<8x32xf32>, vector<8x32xf32>)  : i32 {
      %c7_i32 = arith.constant 7 : i32
      %31 = arith.subi %c7_i32, %arg12 : i32
      %32 = arith.index_cast %arg12 : i32 to index
      %c0_24 = arith.constant 0 : index
      %c0_25 = arith.constant 0 : index
      %33 = vector.load %arg0[%32, %c0_24, %c0_25] : memref<8x8x16xbf16, #tpu.memory_space<vmem>>, vector<1x8x16xbf16>
      %34 = vector.shape_cast %33 : vector<1x8x16xbf16> to vector<8x16xbf16>
      %cst_26 = arith.constant dense<0.000000e+00> : vector<8x128xf32>
      %35 = tpu.matmul %34, %0, %cst_26 {dimension_numbers = #tpu.dot_dimension_numbers<[1], [0], [0], [1], [0, 0, 1, 1], [], []>} : vector<8x16xbf16>, vector<16x128xbf16>, vector<8x128xf32> -> vector<8x128xf32>
      %36 = arith.truncf %arg13 : vector<8x32xf32> to vector<8x32xbf16>
      %cst_27 = arith.constant dense<0.000000e+00> : vector<8x128xf32>
      %37 = tpu.matmul %36, %1, %cst_27 {dimension_numbers = #tpu.dot_dimension_numbers<[1], [0], [0], [1], [0, 0, 1, 1], [], []>} : vector<8x32xbf16>, vector<32x128xbf16>, vector<8x128xf32> -> vector<8x128xf32>
      %38 = arith.addf %35, %37 : vector<8x128xf32>
      %39 = vector.broadcast %2 : vector<1x128xf32> to vector<8x128xf32>
      %40 = arith.addf %38, %39 : vector<8x128xf32>
      %41 = arith.index_cast %31 : i32 to index
      %c0_28 = arith.constant 0 : index
      %c0_29 = arith.constant 0 : index
      %42 = vector.load %arg0[%41, %c0_28, %c0_29] : memref<8x8x16xbf16, #tpu.memory_space<vmem>>, vector<1x8x16xbf16>
      %43 = vector.shape_cast %42 : vector<1x8x16xbf16> to vector<8x16xbf16>
      %cst_30 = arith.constant dense<0.000000e+00> : vector<8x128xf32>
      %44 = tpu.matmul %43, %3, %cst_30 {dimension_numbers = #tpu.dot_dimension_numbers<[1], [0], [0], [1], [0, 0, 1, 1], [], []>} : vector<8x16xbf16>, vector<16x128xbf16>, vector<8x128xf32> -> vector<8x128xf32>
      %45 = arith.truncf %arg15 : vector<8x32xf32> to vector<8x32xbf16>
      %cst_31 = arith.constant dense<0.000000e+00> : vector<8x128xf32>
      %46 = tpu.matmul %45, %4, %cst_31 {dimension_numbers = #tpu.dot_dimension_numbers<[1], [0], [0], [1], [0, 0, 1, 1], [], []>} : vector<8x32xbf16>, vector<32x128xbf16>, vector<8x128xf32> -> vector<8x128xf32>
      %47 = arith.addf %44, %46 : vector<8x128xf32>
      %48 = vector.broadcast %5 : vector<1x128xf32> to vector<8x128xf32>
      %49 = arith.addf %47, %48 : vector<8x128xf32>
      %50 = vector.extract_strided_slice %40 {offsets = [0, 0], sizes = [8, 32], strides = [1, 1]} : vector<8x128xf32> to vector<8x32xf32>
      %51 = arith.negf %50 : vector<8x32xf32>
      %52 = math.exp %51 : vector<8x32xf32>
      %cst_32 = arith.constant 1.000000e+00 : f32
      %53 = vector.broadcast %cst_32 : f32 to vector<8x32xf32>
      %54 = arith.addf %53, %52 : vector<8x32xf32>
      %55 = arith.divf %53, %54 : vector<8x32xf32>
      %56 = vector.extract_strided_slice %40 {offsets = [0, 32], sizes = [8, 32], strides = [1, 1]} : vector<8x128xf32> to vector<8x32xf32>
      %57 = arith.negf %56 : vector<8x32xf32>
      %58 = math.exp %57 : vector<8x32xf32>
      %cst_33 = arith.constant 1.000000e+00 : f32
      %59 = vector.broadcast %cst_33 : f32 to vector<8x32xf32>
      %60 = arith.addf %59, %58 : vector<8x32xf32>
      %61 = arith.divf %59, %60 : vector<8x32xf32>
      %62 = vector.extract_strided_slice %40 {offsets = [0, 64], sizes = [8, 32], strides = [1, 1]} : vector<8x128xf32> to vector<8x32xf32>
      %63 = math.tanh %62 : vector<8x32xf32>
      %64 = vector.extract_strided_slice %40 {offsets = [0, 96], sizes = [8, 32], strides = [1, 1]} : vector<8x128xf32> to vector<8x32xf32>
      %65 = arith.negf %64 : vector<8x32xf32>
      %66 = math.exp %65 : vector<8x32xf32>
      %cst_34 = arith.constant 1.000000e+00 : f32
      %67 = vector.broadcast %cst_34 : f32 to vector<8x32xf32>
      %68 = arith.addf %67, %66 : vector<8x32xf32>
      %69 = arith.divf %67, %68 : vector<8x32xf32>
      %70 = arith.mulf %61, %arg14 : vector<8x32xf32>
      %71 = arith.mulf %55, %63 : vector<8x32xf32>
      %72 = arith.addf %70, %71 : vector<8x32xf32>
      %73 = math.tanh %72 : vector<8x32xf32>
      %74 = arith.mulf %69, %73 : vector<8x32xf32>
      %75 = vector.extract_strided_slice %49 {offsets = [0, 0], sizes = [8, 32], strides = [1, 1]} : vector<8x128xf32> to vector<8x32xf32>
      %76 = arith.negf %75 : vector<8x32xf32>
      %77 = math.exp %76 : vector<8x32xf32>
      %cst_35 = arith.constant 1.000000e+00 : f32
      %78 = vector.broadcast %cst_35 : f32 to vector<8x32xf32>
      %79 = arith.addf %78, %77 : vector<8x32xf32>
      %80 = arith.divf %78, %79 : vector<8x32xf32>
      %81 = vector.extract_strided_slice %49 {offsets = [0, 32], sizes = [8, 32], strides = [1, 1]} : vector<8x128xf32> to vector<8x32xf32>
      %82 = arith.negf %81 : vector<8x32xf32>
      %83 = math.exp %82 : vector<8x32xf32>
      %cst_36 = arith.constant 1.000000e+00 : f32
      %84 = vector.broadcast %cst_36 : f32 to vector<8x32xf32>
      %85 = arith.addf %84, %83 : vector<8x32xf32>
      %86 = arith.divf %84, %85 : vector<8x32xf32>
      %87 = vector.extract_strided_slice %49 {offsets = [0, 64], sizes = [8, 32], strides = [1, 1]} : vector<8x128xf32> to vector<8x32xf32>
      %88 = math.tanh %87 : vector<8x32xf32>
      %89 = vector.extract_strided_slice %49 {offsets = [0, 96], sizes = [8, 32], strides = [1, 1]} : vector<8x128xf32> to vector<8x32xf32>
      %90 = arith.negf %89 : vector<8x32xf32>
      %91 = math.exp %90 : vector<8x32xf32>
      %cst_37 = arith.constant 1.000000e+00 : f32
      %92 = vector.broadcast %cst_37 : f32 to vector<8x32xf32>
      %93 = arith.addf %92, %91 : vector<8x32xf32>
      %94 = arith.divf %92, %93 : vector<8x32xf32>
      %95 = arith.mulf %86, %arg16 : vector<8x32xf32>
      %96 = arith.mulf %80, %88 : vector<8x32xf32>
      %97 = arith.addf %95, %96 : vector<8x32xf32>
      %98 = math.tanh %97 : vector<8x32xf32>
      %99 = arith.mulf %94, %98 : vector<8x32xf32>
      %100 = arith.truncf %74 : vector<8x32xf32> to vector<8x32xbf16>
      %101 = arith.index_cast %arg12 : i32 to index
      %c0_38 = arith.constant 0 : index
      %c0_39 = arith.constant 0 : index
      %102 = vector.load %arg9[%101, %c0_38, %c0_39] : memref<8x8x64xbf16, #tpu.memory_space<vmem>>, vector<1x8x32xbf16>
      %103 = vector.shape_cast %102 : vector<1x8x32xbf16> to vector<8x32xbf16>
      %104 = vector.shape_cast %100 : vector<8x32xbf16> to vector<1x8x32xbf16>
      tpu.vector_store %arg9[%101, %c0_38, %c0_39], %104 {strides = array<i32>} : memref<8x8x64xbf16, #tpu.memory_space<vmem>>, vector<1x8x32xbf16>,
      %105 = arith.truncf %99 : vector<8x32xf32> to vector<8x32xbf16>
      %106 = arith.index_cast %31 : i32 to index
      %c0_40 = arith.constant 0 : index
      %c32 = arith.constant 32 : index
      %107 = vector.load %arg9[%106, %c0_40, %c32] : memref<8x8x64xbf16, #tpu.memory_space<vmem>>, vector<1x8x32xbf16>
      %108 = vector.shape_cast %107 : vector<1x8x32xbf16> to vector<8x32xbf16>
      %109 = vector.shape_cast %105 : vector<8x32xbf16> to vector<1x8x32xbf16>
      tpu.vector_store %arg9[%106, %c0_40, %c32], %109 {strides = array<i32>} : memref<8x8x64xbf16, #tpu.memory_space<vmem>>, vector<1x8x32xbf16>,
      scf.yield %74, %72, %99, %97 : vector<8x32xf32>, vector<8x32xf32>, vector<8x32xf32>, vector<8x32xf32>
    }
    %c8_i32_11 = arith.constant 8 : i32
    %c0_12 = arith.constant 0 : index
    %c0_13 = arith.constant 0 : index
    %9 = vector.load %arg7[%c0_12, %c0_13] : memref<64x32xbf16, #tpu.memory_space<vmem>>, vector<64x32xbf16>
    %c0_14 = arith.constant 0 : index
    %c0_15 = arith.constant 0 : index
    %10 = vector.load %arg8[%c0_14, %c0_15] : memref<1x32xf32, #tpu.memory_space<vmem>>, vector<1x32xf32>
    %11 = arith.truncf %8#0 : vector<8x32xf32> to vector<8x32xbf16>
    %12 = vector.extract_strided_slice %9 {offsets = [0, 0], sizes = [32, 32], strides = [1, 1]} : vector<64x32xbf16> to vector<32x32xbf16>
    %cst_16 = arith.constant dense<0.000000e+00> : vector<8x32xf32>
    %13 = tpu.matmul %11, %12, %cst_16 {dimension_numbers = #tpu.dot_dimension_numbers<[1], [0], [0], [1], [0, 0, 1, 1], [], []>} : vector<8x32xbf16>, vector<32x32xbf16>, vector<8x32xf32> -> vector<8x32xf32>
    %14 = arith.truncf %8#2 : vector<8x32xf32> to vector<8x32xbf16>
    %15 = vector.extract_strided_slice %9 {offsets = [32, 0], sizes = [32, 32], strides = [1, 1]} : vector<64x32xbf16> to vector<32x32xbf16>
    %cst_17 = arith.constant dense<0.000000e+00> : vector<8x32xf32>
    %16 = tpu.matmul %14, %15, %cst_17 {dimension_numbers = #tpu.dot_dimension_numbers<[1], [0], [0], [1], [0, 0, 1, 1], [], []>} : vector<8x32xbf16>, vector<32x32xbf16>, vector<8x32xf32> -> vector<8x32xf32>
    %17 = arith.addf %13, %16 : vector<8x32xf32>
    %18 = vector.broadcast %10 : vector<1x32xf32> to vector<8x32xf32>
    %19 = arith.addf %17, %18 : vector<8x32xf32>
    %c0_18 = arith.constant 0 : index
    %c0_19 = arith.constant 0 : index
    %20 = vector.load %arg10[%c0_18, %c0_19] : memref<8x32xf32, #tpu.memory_space<vmem>>, vector<8x32xf32>
    tpu.vector_store %arg10[%c0_18, %c0_19], %19 {strides = array<i32>} : memref<8x32xf32, #tpu.memory_space<vmem>>, vector<8x32xf32>,
    %21 = arith.truncf %8#1 : vector<8x32xf32> to vector<8x32xbf16>
    %22 = vector.extract_strided_slice %9 {offsets = [0, 0], sizes = [32, 32], strides = [1, 1]} : vector<64x32xbf16> to vector<32x32xbf16>
    %cst_20 = arith.constant dense<0.000000e+00> : vector<8x32xf32>
    %23 = tpu.matmul %21, %22, %cst_20 {dimension_numbers = #tpu.dot_dimension_numbers<[1], [0], [0], [1], [0, 0, 1, 1], [], []>} : vector<8x32xbf16>, vector<32x32xbf16>, vector<8x32xf32> -> vector<8x32xf32>
    %24 = arith.truncf %8#3 : vector<8x32xf32> to vector<8x32xbf16>
    %25 = vector.extract_strided_slice %9 {offsets = [32, 0], sizes = [32, 32], strides = [1, 1]} : vector<64x32xbf16> to vector<32x32xbf16>
    %cst_21 = arith.constant dense<0.000000e+00> : vector<8x32xf32>
    %26 = tpu.matmul %24, %25, %cst_21 {dimension_numbers = #tpu.dot_dimension_numbers<[1], [0], [0], [1], [0, 0, 1, 1], [], []>} : vector<8x32xbf16>, vector<32x32xbf16>, vector<8x32xf32> -> vector<8x32xf32>
    %27 = arith.addf %23, %26 : vector<8x32xf32>
    %28 = vector.broadcast %10 : vector<1x32xf32> to vector<8x32xf32>
    %29 = arith.addf %27, %28 : vector<8x32xf32>
    %c0_22 = arith.constant 0 : index
    %c0_23 = arith.constant 0 : index
    %30 = vector.load %arg11[%c0_22, %c0_23] : memref<8x32xf32, #tpu.memory_space<vmem>>, vector<8x32xf32>
    tpu.vector_store %arg11[%c0_22, %c0_23], %29 {strides = array<i32>} : memref<8x32xf32, #tpu.memory_space<vmem>>, vector<8x32xf32>,
    return
  }
}

module attributes {stable_mosaic.version = 11 : i64} {
  func.func @_decoder_kernel(%arg0: i32, %arg1: memref<4x8x16xbf16, #tpu.memory_space<vmem>>, %arg2: memref<8x8x64xbf16, #tpu.memory_space<vmem>>, %arg3: memref<8x8xf32, #tpu.memory_space<vmem>>, %arg4: memref<1x32xf32, #tpu.memory_space<vmem>>, %arg5: memref<64x128xbf16, #tpu.memory_space<vmem>>, %arg6: memref<16x128xbf16, #tpu.memory_space<vmem>>, %arg7: memref<32x128xbf16, #tpu.memory_space<vmem>>, %arg8: memref<1x128xf32, #tpu.memory_space<vmem>>, %arg9: memref<32x128xbf16, #tpu.memory_space<vmem>>, %arg10: memref<1x128xf32, #tpu.memory_space<vmem>>, %arg11: memref<8x32xf32, #tpu.memory_space<vmem>>, %arg12: memref<8x32xf32, #tpu.memory_space<vmem>>, %arg13: memref<4x8x128xbf16, #tpu.memory_space<vmem>>, %arg14: memref<8x32xf32, #tpu.memory_space<vmem>>, %arg15: memref<8x32xf32, #tpu.memory_space<vmem>>, %arg16: memref<4x8x32xbf16, #tpu.memory_space<vmem>>) attributes {dimension_semantics = [#tpu.dimension_semantics<arbitrary>], iteration_bounds = array<i64: 2>, scalar_prefetch = 0 : i64, scratch_operands = 3 : i64, tpu.core_type = #tpu.core_type<tc>, window_params = [{transform_indices = @transform_0, window_bounds = array<i64: 4, 8, 16>}, {pipeline_mode = #tpu.pipeline_mode<synchronous>, transform_indices = @transform_1, window_bounds = array<i64: 8, 8, 64>}, {pipeline_mode = #tpu.pipeline_mode<synchronous>, transform_indices = @transform_2, window_bounds = array<i64: 8, 8>}, {pipeline_mode = #tpu.pipeline_mode<synchronous>, transform_indices = @transform_3, window_bounds = array<i64: 1, 32>}, {pipeline_mode = #tpu.pipeline_mode<synchronous>, transform_indices = @transform_4, window_bounds = array<i64: 64, 128>}, {pipeline_mode = #tpu.pipeline_mode<synchronous>, transform_indices = @transform_5, window_bounds = array<i64: 16, 128>}, {pipeline_mode = #tpu.pipeline_mode<synchronous>, transform_indices = @transform_6, window_bounds = array<i64: 32, 128>}, {pipeline_mode = #tpu.pipeline_mode<synchronous>, transform_indices = @transform_7, window_bounds = array<i64: 1, 128>}, {pipeline_mode = #tpu.pipeline_mode<synchronous>, transform_indices = @transform_8, window_bounds = array<i64: 32, 128>}, {pipeline_mode = #tpu.pipeline_mode<synchronous>, transform_indices = @transform_9, window_bounds = array<i64: 1, 128>}, {pipeline_mode = #tpu.pipeline_mode<synchronous>, transform_indices = @transform_10, window_bounds = array<i64: 8, 32>}, {pipeline_mode = #tpu.pipeline_mode<synchronous>, transform_indices = @transform_11, window_bounds = array<i64: 8, 32>}, {transform_indices = @transform_12, window_bounds = array<i64: 4, 8, 128>}]} {
    %c0_i32 = arith.constant 0 : i32
    %0 = arith.cmpi eq, %arg0, %c0_i32 : i32
    %1 = arith.extui %0 : i1 to i32
    %c0_i32_0 = arith.constant 0 : i32
    %2 = arith.cmpi ne, %1, %c0_i32_0 : i32
    scf.if %2 {
      %c0_35 = arith.constant 0 : index
      %c0_36 = arith.constant 0 : index
      %26 = vector.load %arg11[%c0_35, %c0_36] : memref<8x32xf32, #tpu.memory_space<vmem>>, vector<8x32xf32>
      %c0_37 = arith.constant 0 : index
      %c0_38 = arith.constant 0 : index
      %27 = vector.load %arg14[%c0_37, %c0_38] : memref<8x32xf32, #tpu.memory_space<vmem>>, vector<8x32xf32>
      tpu.vector_store %arg14[%c0_37, %c0_38], %26 {strides = array<i32>} : memref<8x32xf32, #tpu.memory_space<vmem>>, vector<8x32xf32>,
      %c0_39 = arith.constant 0 : index
      %c0_40 = arith.constant 0 : index
      %28 = vector.load %arg12[%c0_39, %c0_40] : memref<8x32xf32, #tpu.memory_space<vmem>>, vector<8x32xf32>
      %c0_41 = arith.constant 0 : index
      %c0_42 = arith.constant 0 : index
      %29 = vector.load %arg15[%c0_41, %c0_42] : memref<8x32xf32, #tpu.memory_space<vmem>>, vector<8x32xf32>
      tpu.vector_store %arg15[%c0_41, %c0_42], %28 {strides = array<i32>} : memref<8x32xf32, #tpu.memory_space<vmem>>, vector<8x32xf32>,
    } else {
    }
    %c0 = arith.constant 0 : index
    %c0_1 = arith.constant 0 : index
    %c0_2 = arith.constant 0 : index
    %3 = vector.load %arg2[%c0, %c0_1, %c0_2] : memref<8x8x64xbf16, #tpu.memory_space<vmem>>, vector<8x8x64xbf16>
    %c0_3 = arith.constant 0 : index
    %c0_4 = arith.constant 0 : index
    %4 = vector.load %arg3[%c0_3, %c0_4] : memref<8x8xf32, #tpu.memory_space<vmem>>, vector<8x8xf32>
    %c0_5 = arith.constant 0 : index
    %c0_6 = arith.constant 0 : index
    %5 = vector.load %arg4[%c0_5, %c0_6] : memref<1x32xf32, #tpu.memory_space<vmem>>, vector<1x32xf32>
    %c0_7 = arith.constant 0 : index
    %c0_8 = arith.constant 0 : index
    %6 = vector.load %arg5[%c0_7, %c0_8] : memref<64x128xbf16, #tpu.memory_space<vmem>>, vector<64x128xbf16>
    %c0_9 = arith.constant 0 : index
    %c0_10 = arith.constant 0 : index
    %7 = vector.load %arg6[%c0_9, %c0_10] : memref<16x128xbf16, #tpu.memory_space<vmem>>, vector<16x128xbf16>
    %c0_11 = arith.constant 0 : index
    %c0_12 = arith.constant 0 : index
    %8 = vector.load %arg7[%c0_11, %c0_12] : memref<32x128xbf16, #tpu.memory_space<vmem>>, vector<32x128xbf16>
    %c0_13 = arith.constant 0 : index
    %c0_14 = arith.constant 0 : index
    %9 = vector.load %arg8[%c0_13, %c0_14] : memref<1x128xf32, #tpu.memory_space<vmem>>, vector<1x128xf32>
    %c0_15 = arith.constant 0 : index
    %c0_16 = arith.constant 0 : index
    %10 = vector.load %arg14[%c0_15, %c0_16] : memref<8x32xf32, #tpu.memory_space<vmem>>, vector<8x32xf32>
    %c0_17 = arith.constant 0 : index
    %c0_18 = arith.constant 0 : index
    %11 = vector.load %arg15[%c0_17, %c0_18] : memref<8x32xf32, #tpu.memory_space<vmem>>, vector<8x32xf32>
    %c0_i32_19 = arith.constant 0 : i32
    %c4_i32 = arith.constant 4 : i32
    %12 = arith.addi %c0_i32_19, %c4_i32 : i32
    %c1_i32 = arith.constant 1 : i32
    %13:2 = scf.for %arg17 = %c0_i32_19 to %12 step %c1_i32 iter_args(%arg18 = %10, %arg19 = %11) -> (vector<8x32xf32>, vector<8x32xf32>)  : i32 {
      %26 = vector.broadcast %5 : vector<1x32xf32> to vector<8x32xf32>
      %27 = arith.mulf %arg18, %26 : vector<8x32xf32>
      %cst_35 = arith.constant dense<0.000000e+00> : vector<8xf32>
      %28 = vector.multi_reduction <add>, %27, %cst_35 [1] : vector<8x32xf32> to vector<8xf32>
      %29 = vector.shape_cast %28 : vector<8xf32> to vector<8x1xf32>
      %30 = vector.broadcast %29 : vector<8x1xf32> to vector<8x8xf32>
      %31 = arith.addf %4, %30 : vector<8x8xf32>
      %cst_36 = arith.constant 0.000000e+00 : f32
      %32 = vector.broadcast %cst_36 : f32 to vector<8x8xf32>
      %33 = arith.maximumf %31, %32 : vector<8x8xf32>
      %cst_37 = arith.constant dense<0xFF800000> : vector<8xf32>
      %34 = vector.multi_reduction <maximumf>, %33, %cst_37 [1] : vector<8x8xf32> to vector<8xf32>
      %35 = vector.shape_cast %34 : vector<8xf32> to vector<8x1xf32>
      %36 = vector.broadcast %35 : vector<8x1xf32> to vector<8x8xf32>
      %37 = arith.subf %33, %36 : vector<8x8xf32>
      %38 = math.exp %37 : vector<8x8xf32>
      %cst_38 = arith.constant dense<0.000000e+00> : vector<8xf32>
      %39 = vector.multi_reduction <add>, %38, %cst_38 [1] : vector<8x8xf32> to vector<8xf32>
      %40 = vector.shape_cast %39 : vector<8xf32> to vector<8x1xf32>
      %41 = tpu.reciprocal %40 {approx = true} : vector<8x1xf32> -> vector<8x1xf32>
      %42 = vector.broadcast %41 : vector<8x1xf32> to vector<8x8xf32>
      %43 = arith.mulf %38, %42 : vector<8x8xf32>
      %44 = arith.truncf %43 : vector<8x8xf32> to vector<8x8xbf16>
      %45 = vector.shape_cast %44 : vector<8x8xbf16> to vector<8x1x8xbf16>
      "tpu.trace_start"() <{level = 10 : i32, message = "bqs,bsd->bqd"}> : () -> ()
      %cst_39 = arith.constant dense<0.000000e+00> : vector<8x1x64xf32>
      %46 = tpu.matmul %45, %3, %cst_39 {dimension_numbers = #tpu.dot_dimension_numbers<[2], [1], [1], [2], [0, 0, 0, 1, 1, 2], [0], [0]>} : vector<8x1x8xbf16>, vector<8x8x64xbf16>, vector<8x1x64xf32> -> vector<8x1x64xf32>
      "tpu.trace_stop"() : () -> ()
      %47 = vector.shape_cast %46 : vector<8x1x64xf32> to vector<8x64xf32>
      %48 = arith.truncf %47 : vector<8x64xf32> to vector<8x64xbf16>
      %cst_40 = arith.constant dense<0.000000e+00> : vector<8x128xf32>
      %49 = tpu.matmul %48, %6, %cst_40 {dimension_numbers = #tpu.dot_dimension_numbers<[1], [0], [0], [1], [0, 0, 1, 1], [], []>} : vector<8x64xbf16>, vector<64x128xbf16>, vector<8x128xf32> -> vector<8x128xf32>
      %50 = arith.index_cast %arg17 : i32 to index
      %c0_41 = arith.constant 0 : index
      %c0_42 = arith.constant 0 : index
      %51 = vector.load %arg1[%50, %c0_41, %c0_42] : memref<4x8x16xbf16, #tpu.memory_space<vmem>>, vector<1x8x16xbf16>
      %52 = vector.shape_cast %51 : vector<1x8x16xbf16> to vector<8x16xbf16>
      %cst_43 = arith.constant dense<0.000000e+00> : vector<8x128xf32>
      %53 = tpu.matmul %52, %7, %cst_43 {dimension_numbers = #tpu.dot_dimension_numbers<[1], [0], [0], [1], [0, 0, 1, 1], [], []>} : vector<8x16xbf16>, vector<16x128xbf16>, vector<8x128xf32> -> vector<8x128xf32>
      %54 = arith.addf %49, %53 : vector<8x128xf32>
      %55 = arith.truncf %arg18 : vector<8x32xf32> to vector<8x32xbf16>
      %cst_44 = arith.constant dense<0.000000e+00> : vector<8x128xf32>
      %56 = tpu.matmul %55, %8, %cst_44 {dimension_numbers = #tpu.dot_dimension_numbers<[1], [0], [0], [1], [0, 0, 1, 1], [], []>} : vector<8x32xbf16>, vector<32x128xbf16>, vector<8x128xf32> -> vector<8x128xf32>
      %57 = arith.addf %54, %56 : vector<8x128xf32>
      %58 = vector.broadcast %9 : vector<1x128xf32> to vector<8x128xf32>
      %59 = arith.addf %57, %58 : vector<8x128xf32>
      %60 = vector.extract_strided_slice %59 {offsets = [0, 0], sizes = [8, 32], strides = [1, 1]} : vector<8x128xf32> to vector<8x32xf32>
      %61 = arith.negf %60 : vector<8x32xf32>
      %62 = math.exp %61 : vector<8x32xf32>
      %cst_45 = arith.constant 1.000000e+00 : f32
      %63 = vector.broadcast %cst_45 : f32 to vector<8x32xf32>
      %64 = arith.addf %63, %62 : vector<8x32xf32>
      %65 = arith.divf %63, %64 : vector<8x32xf32>
      %66 = vector.extract_strided_slice %59 {offsets = [0, 32], sizes = [8, 32], strides = [1, 1]} : vector<8x128xf32> to vector<8x32xf32>
      %67 = arith.negf %66 : vector<8x32xf32>
      %68 = math.exp %67 : vector<8x32xf32>
      %cst_46 = arith.constant 1.000000e+00 : f32
      %69 = vector.broadcast %cst_46 : f32 to vector<8x32xf32>
      %70 = arith.addf %69, %68 : vector<8x32xf32>
      %71 = arith.divf %69, %70 : vector<8x32xf32>
      %72 = vector.extract_strided_slice %59 {offsets = [0, 64], sizes = [8, 32], strides = [1, 1]} : vector<8x128xf32> to vector<8x32xf32>
      %73 = math.tanh %72 : vector<8x32xf32>
      %74 = vector.extract_strided_slice %59 {offsets = [0, 96], sizes = [8, 32], strides = [1, 1]} : vector<8x128xf32> to vector<8x32xf32>
      %75 = arith.negf %74 : vector<8x32xf32>
      %76 = math.exp %75 : vector<8x32xf32>
      %cst_47 = arith.constant 1.000000e+00 : f32
      %77 = vector.broadcast %cst_47 : f32 to vector<8x32xf32>
      %78 = arith.addf %77, %76 : vector<8x32xf32>
      %79 = arith.divf %77, %78 : vector<8x32xf32>
      %80 = arith.mulf %71, %arg19 : vector<8x32xf32>
      %81 = arith.mulf %65, %73 : vector<8x32xf32>
      %82 = arith.addf %80, %81 : vector<8x32xf32>
      %83 = math.tanh %82 : vector<8x32xf32>
      %84 = arith.mulf %79, %83 : vector<8x32xf32>
      %85 = arith.truncf %84 : vector<8x32xf32> to vector<8x32xbf16>
      %86 = arith.index_cast %arg17 : i32 to index
      %c0_48 = arith.constant 0 : index
      %c0_49 = arith.constant 0 : index
      %87 = vector.load %arg16[%86, %c0_48, %c0_49] : memref<4x8x32xbf16, #tpu.memory_space<vmem>>, vector<1x8x32xbf16>
      %88 = vector.shape_cast %87 : vector<1x8x32xbf16> to vector<8x32xbf16>
      %89 = vector.shape_cast %85 : vector<8x32xbf16> to vector<1x8x32xbf16>
      tpu.vector_store %arg16[%86, %c0_48, %c0_49], %89 {strides = array<i32>} : memref<4x8x32xbf16, #tpu.memory_space<vmem>>, vector<1x8x32xbf16>,
      scf.yield %84, %82 : vector<8x32xf32>, vector<8x32xf32>
    }
    %c4_i32_20 = arith.constant 4 : i32
    %c0_21 = arith.constant 0 : index
    %c0_22 = arith.constant 0 : index
    %14 = vector.load %arg14[%c0_21, %c0_22] : memref<8x32xf32, #tpu.memory_space<vmem>>, vector<8x32xf32>
    tpu.vector_store %arg14[%c0_21, %c0_22], %13#0 {strides = array<i32>} : memref<8x32xf32, #tpu.memory_space<vmem>>, vector<8x32xf32>,
    %c0_23 = arith.constant 0 : index
    %c0_24 = arith.constant 0 : index
    %15 = vector.load %arg15[%c0_23, %c0_24] : memref<8x32xf32, #tpu.memory_space<vmem>>, vector<8x32xf32>
    tpu.vector_store %arg15[%c0_23, %c0_24], %13#1 {strides = array<i32>} : memref<8x32xf32, #tpu.memory_space<vmem>>, vector<8x32xf32>,
    %c0_25 = arith.constant 0 : index
    %c0_26 = arith.constant 0 : index
    %c0_27 = arith.constant 0 : index
    %16 = vector.load %arg16[%c0_25, %c0_26, %c0_27] : memref<4x8x32xbf16, #tpu.memory_space<vmem>>, vector<4x8x32xbf16>
    %17 = vector.shape_cast %16 : vector<4x8x32xbf16> to vector<32x32xbf16>
    %c0_28 = arith.constant 0 : index
    %c0_29 = arith.constant 0 : index
    %18 = vector.load %arg9[%c0_28, %c0_29] : memref<32x128xbf16, #tpu.memory_space<vmem>>, vector<32x128xbf16>
    %cst = arith.constant dense<0.000000e+00> : vector<32x128xf32>
    %19 = tpu.matmul %17, %18, %cst {dimension_numbers = #tpu.dot_dimension_numbers<[1], [0], [0], [1], [0, 0, 1, 1], [], []>} : vector<32x32xbf16>, vector<32x128xbf16>, vector<32x128xf32> -> vector<32x128xf32>
    %c0_30 = arith.constant 0 : index
    %c0_31 = arith.constant 0 : index
    %20 = vector.load %arg10[%c0_30, %c0_31] : memref<1x128xf32, #tpu.memory_space<vmem>>, vector<1x128xf32>
    %21 = vector.broadcast %20 : vector<1x128xf32> to vector<32x128xf32>
    %22 = arith.addf %19, %21 : vector<32x128xf32>
    %23 = vector.shape_cast %22 : vector<32x128xf32> to vector<4x8x128xf32>
    %24 = arith.truncf %23 : vector<4x8x128xf32> to vector<4x8x128xbf16>
    %c0_32 = arith.constant 0 : index
    %c0_33 = arith.constant 0 : index
    %c0_34 = arith.constant 0 : index
    %25 = vector.load %arg13[%c0_32, %c0_33, %c0_34] : memref<4x8x128xbf16, #tpu.memory_space<vmem>>, vector<4x8x128xbf16>
    tpu.vector_store %arg13[%c0_32, %c0_33, %c0_34], %24 {strides = array<i32>} : memref<4x8x128xbf16, #tpu.memory_space<vmem>>, vector<4x8x128xbf16>,
    return
  }
  func.func @transform_0(%arg0: i32) -> (i32, i32, i32) {
    %c0_i32 = arith.constant 0 : i32
    %c0_i32_0 = arith.constant 0 : i32
    %c0_i32_1 = arith.constant 0 : i32
    return %arg0, %c0_i32, %c0_i32_0 : i32, i32, i32
  }
  func.func @transform_1(%arg0: i32) -> (i32, i32, i32) {
    %c0_i32 = arith.constant 0 : i32
    %c0_i32_0 = arith.constant 0 : i32
    %c0_i32_1 = arith.constant 0 : i32
    %c0_i32_2 = arith.constant 0 : i32
    return %c0_i32, %c0_i32_0, %c0_i32_1 : i32, i32, i32
  }
  func.func @transform_2(%arg0: i32) -> (i32, i32) {
    %c0_i32 = arith.constant 0 : i32
    %c0_i32_0 = arith.constant 0 : i32
    %c0_i32_1 = arith.constant 0 : i32
    return %c0_i32, %c0_i32_0 : i32, i32
  }
  func.func @transform_3(%arg0: i32) -> (i32, i32) {
    %c0_i32 = arith.constant 0 : i32
    %c0_i32_0 = arith.constant 0 : i32
    %c0_i32_1 = arith.constant 0 : i32
    return %c0_i32, %c0_i32_0 : i32, i32
  }
  func.func @transform_4(%arg0: i32) -> (i32, i32) {
    %c0_i32 = arith.constant 0 : i32
    %c0_i32_0 = arith.constant 0 : i32
    %c0_i32_1 = arith.constant 0 : i32
    return %c0_i32, %c0_i32_0 : i32, i32
  }
  func.func @transform_5(%arg0: i32) -> (i32, i32) {
    %c0_i32 = arith.constant 0 : i32
    %c0_i32_0 = arith.constant 0 : i32
    %c0_i32_1 = arith.constant 0 : i32
    return %c0_i32, %c0_i32_0 : i32, i32
  }
  func.func @transform_6(%arg0: i32) -> (i32, i32) {
    %c0_i32 = arith.constant 0 : i32
    %c0_i32_0 = arith.constant 0 : i32
    %c0_i32_1 = arith.constant 0 : i32
    return %c0_i32, %c0_i32_0 : i32, i32
  }
  func.func @transform_7(%arg0: i32) -> (i32, i32) {
    %c0_i32 = arith.constant 0 : i32
    %c0_i32_0 = arith.constant 0 : i32
    %c0_i32_1 = arith.constant 0 : i32
    return %c0_i32, %c0_i32_0 : i32, i32
  }
  func.func @transform_8(%arg0: i32) -> (i32, i32) {
    %c0_i32 = arith.constant 0 : i32
    %c0_i32_0 = arith.constant 0 : i32
    %c0_i32_1 = arith.constant 0 : i32
    return %c0_i32, %c0_i32_0 : i32, i32
  }
  func.func @transform_9(%arg0: i32) -> (i32, i32) {
    %c0_i32 = arith.constant 0 : i32
    %c0_i32_0 = arith.constant 0 : i32
    %c0_i32_1 = arith.constant 0 : i32
    return %c0_i32, %c0_i32_0 : i32, i32
  }
  func.func @transform_10(%arg0: i32) -> (i32, i32) {
    %c0_i32 = arith.constant 0 : i32
    %c0_i32_0 = arith.constant 0 : i32
    %c0_i32_1 = arith.constant 0 : i32
    return %c0_i32, %c0_i32_0 : i32, i32
  }
  func.func @transform_11(%arg0: i32) -> (i32, i32) {
    %c0_i32 = arith.constant 0 : i32
    %c0_i32_0 = arith.constant 0 : i32
    %c0_i32_1 = arith.constant 0 : i32
    return %c0_i32, %c0_i32_0 : i32, i32
  }
  func.func @transform_12(%arg0: i32) -> (i32, i32, i32) {
    %c0_i32 = arith.constant 0 : i32
    %c0_i32_0 = arith.constant 0 : i32
    %c0_i32_1 = arith.constant 0 : i32
    return %arg0, %c0_i32, %c0_i32_0 : i32, i32, i32
  }
}

</mosaic_0001>

<llo_original>
// kernel: seq2seq_forward.2
$region0: #{seq2seq_forward.2}
  #allocation0 [shape = 'u32[]', space=smem, size = 0x4, offset = 0x4, fixed_abs, tag = 'smem constant byte address 0x4 - core index']
  #allocation1 [shape = 'u32[72,128]{1,0:T(1,128)}', space=vmem, size = 0x9000, scoped, tag = 'internal scratch']
  %s0 = inlined_call_operand.vmem [shape: bf16[8,8,16], index: 0, kind: input, shape index: {}]
  %s1 = inlined_call_operand.vmem [shape: bf16[16,128], index: 1, kind: input, shape index: {}]
  %s2 = inlined_call_operand.vmem [shape: bf16[32,128], index: 2, kind: input, shape index: {}]
  %s3 = inlined_call_operand.vmem [shape: f32[1,128], index: 3, kind: input, shape index: {}]
  %s4 = inlined_call_operand.vmem [shape: bf16[16,128], index: 4, kind: input, shape index: {}]
  %s5 = inlined_call_operand.vmem [shape: bf16[32,128], index: 5, kind: input, shape index: {}]
  %s6 = inlined_call_operand.vmem [shape: f32[1,128], index: 6, kind: input, shape index: {}]
  %s7 = inlined_call_operand.vmem [shape: bf16[64,32], index: 7, kind: input, shape index: {}]
  %s8 = inlined_call_operand.vmem [shape: f32[1,32], index: 8, kind: input, shape index: {}]
  %s9 = inlined_call_operand.vmem [shape: bf16[8,8,64], index: 9, kind: output, shape index: {0}]
  %s10 = inlined_call_operand.vmem [shape: f32[8,32], index: 10, kind: output, shape index: {1}]
  %s11 = inlined_call_operand.vmem [shape: f32[8,32], index: 11, kind: output, shape index: {2}]
  %12 = xla_tuple %s9, %s10, %s11
  %s13 = sld [smem:[#allocation0]]
  $region69: #{seq2seq_forward.2} parent=0
    _
  %s15 = ssub.s32 1, %s13
  %s16 = scalar_select 0, %s15, %s13
  // Predicated region
  $region2: #{seq2seq_forward.2} parent=0 // pred_check
    _
  $region3: #{seq2seq_forward.2} parent=0 // pred_check_branch
    %18 = sbr.rel (0) target = $region5
  $region4: #{seq2seq_forward.2} parent=0 // pred_region
    _
  $region5: #{seq2seq_forward.2} parent=0 // pred_fallthru
    _
  // Predicated region
  $region6: #{seq2seq_forward.2} parent=0 // pred_check
    _
  $region7: #{seq2seq_forward.2} parent=0 // pred_check_branch
    %20 = sbr.rel (0) target = $region9
  $region8: #{seq2seq_forward.2} parent=0 // pred_region
    _
  $region9: #{seq2seq_forward.2} parent=0 // pred_fallthru
    _
  // Predicated region
  $region10: #{seq2seq_forward.2} parent=0 // pred_check
    _
  $region11: #{seq2seq_forward.2} parent=0 // pred_check_branch
    %22 = sbr.rel (0) target = $region13
  $region12: #{seq2seq_forward.2} parent=0 // pred_region
    _
  $region13: #{seq2seq_forward.2} parent=0 // pred_fallthru
    _
  // Predicated region
  $region14: #{seq2seq_forward.2} parent=0 // pred_check
    _
  $region15: #{seq2seq_forward.2} parent=0 // pred_check_branch
    %24 = sbr.rel (0) target = $region17
  $region16: #{seq2seq_forward.2} parent=0 // pred_region
    _
  $region17: #{seq2seq_forward.2} parent=0 // pred_fallthru
    _
  // Predicated region
  $region18: #{seq2seq_forward.2} parent=0 // pred_check
    _
  $region19: #{seq2seq_forward.2} parent=0 // pred_check_branch
    %26 = sbr.rel (0) target = $region21
  $region20: #{seq2seq_forward.2} parent=0 // pred_region
    _
  $region21: #{seq2seq_forward.2} parent=0 // pred_fallthru
    _
  // Predicated region
  $region22: #{seq2seq_forward.2} parent=0 // pred_check
    _
  $region23: #{seq2seq_forward.2} parent=0 // pred_check_branch
    %28 = sbr.rel (0) target = $region25
  $region24: #{seq2seq_forward.2} parent=0 // pred_region
    _
  $region25: #{seq2seq_forward.2} parent=0 // pred_fallthru
    _
  // Predicated region
  $region26: #{seq2seq_forward.2} parent=0 // pred_check
    _
  $region27: #{seq2seq_forward.2} parent=0 // pred_check_branch
    %30 = sbr.rel (0) target = $region29
  $region28: #{seq2seq_forward.2} parent=0 // pred_region
    _
  $region29: #{seq2seq_forward.2} parent=0 // pred_fallthru
    _
  // Predicated region
  $region30: #{seq2seq_forward.2} parent=0 // pred_check
    _
  $region31: #{seq2seq_forward.2} parent=0 // pred_check_branch
    %32 = sbr.rel (0) target = $region33
  $region32: #{seq2seq_forward.2} parent=0 // pred_region
    _
  $region33: #{seq2seq_forward.2} parent=0 // pred_fallthru
    _
  // Predicated region
  $region34: #{seq2seq_forward.2} parent=0 // pred_check
    _
  $region35: #{seq2seq_forward.2} parent=0 // pred_check_branch
    %34 = sbr.rel (0) target = $region37
  $region36: #{seq2seq_forward.2} parent=0 // pred_region
    _
  $region37: #{seq2seq_forward.2} parent=0 // pred_fallthru
    _
  %v36 = vld [vmem:[%s1] sm:$0xf]
  %v37 = vld [vmem:[%s1 + $0x4] sm:$0xf]
  %v38 = vld [vmem:[%s2] sm:$0xf]
  %v39 = vld [vmem:[%s2 + $0x4] sm:$0xf]
  %v40 = vld [vmem:[%s2 + $0x8] sm:$0xf]
  %v41 = vld [vmem:[%s2 + $0xc] sm:$0xf]
  %v42 = vld [vmem:[%s3] sm:$0x1]
  %v43 = vld [vmem:[%s4] sm:$0xf]
  %v44 = vld [vmem:[%s4 + $0x4] sm:$0xf]
  %v45 = vld [vmem:[%s5] sm:$0xf]
  %v46 = vld [vmem:[%s5 + $0x4] sm:$0xf]
  %v47 = vld [vmem:[%s5 + $0x8] sm:$0xf]
  %v48 = vld [vmem:[%s5 + $0xc] sm:$0xf]
  %v49 = vld [vmem:[%s6] sm:$0x1]
  loop: start=0, step=1, limit=8
  $region38: #{seq2seq_forward.2} parent=0 // loop_pre_header
    _
  $region39: #{seq2seq_forward.2} parent=0 // loop_header
    %s51 = sphi 0, %s55
    %p52 = scmp.ge.s32.totalorder %s51, 8
    %v56 = vphi 0.0, %v221
    %v57 = vphi 0.0, %v215
    %v58 = vphi 0.0, %v258
    %v59 = vphi 0.0, %v252
  $region40: #{seq2seq_forward.2} parent=0 // loop_header_branch
    %54 = sbr.rel (%p52) target = $region44
  $region41: #{seq2seq_forward.2} parent=0 // loop_body
    %s60 = ssub.s32 7, %s51
    %s61 = smul.addr %s51, 4
    %s62 = scalar_lea.vmem %s0, %s61
    %v63 = vld [vmem:[%s62] sm:$0xf]
    %v64 = vpack.c.bf16 %v56, %v56
    %66 = vrot.lane.b32.xlu0 %v64, 32
    %v67 = vpop.permute.xlu0 %66
    %v72 = vunpack.c.l.b16 %v38
    %v73 = vunpack.c.l.b16 %v39
    %v74 = vunpack.c.l.b16 %v40
    %v75 = vunpack.c.l.b16 %v41
    %v76 = vpack.c.b16 %v73, %v72
    %v77 = vpack.c.b16 %v75, %v74
    %vm80 = vcmask 261120
    %v82 = vsel %vm80, %v67, 0
    %84 = vmatpush.bf16.msra.mxu0 0
    %85 = vmatpush.bf16.msra.mxu0 0
    %86 = vmatpush.bf16.msra.mxu0 0
    %87 = vmatpush.bf16.msra.mxu0 0
    %88 = vmatpush.bf16.msra.mxu0 0
    %89 = vmatpush.bf16.msra.mxu0 0
    %90 = vmatpush.bf16.msra.mxu0 %v77
    %91 = vmatpush.bf16.msra.mxu0 %v76
    %92 = vmatmul.bf16.gmra.mxu0 %v82
    %v93 = vpop.f32.mrf.mxu0
    %v94 = vadd.f32 0.0, %v93
    %v95 = vpop.f32.mrf.mxu0
    %96 = vdwg.mxu0
    %v99 = vunpack.c.l.b16 %v36
    %v100 = vunpack.c.l.b16 %v37
    %v101 = vpack.c.b16 %v100, %v99
    %vm103 = vcmask 130048
    %v105 = vsel %vm103, %v63, 0
    %107 = vmatpush.bf16.msra.mxu0 0
    %108 = vmatpush.bf16.msra.mxu0 0
    %109 = vmatpush.bf16.msra.mxu0 0
    %110 = vmatpush.bf16.msra.mxu0 0
    %111 = vmatpush.bf16.msra.mxu0 0
    %112 = vmatpush.bf16.msra.mxu0 0
    %113 = vmatpush.bf16.msra.mxu0 0
    %114 = vmatpush.bf16.msra.mxu0 %v101
    %115 = vmatmul.bf16.gmra.mxu0 %v105
    %v116 = vpop.f32.mrf.mxu0
    %v117 = vadd.f32 %v94, %v116
    %v118 = vpop.f32.mrf.mxu0
    %119 = vdwg.mxu0
    %v121 = vperm.slane %v42, 0
    %v123 = vadd.f32 %v117, %v121
    %s124 = smul.addr %s60, 4
    %s125 = scalar_lea.vmem %s0, %s124
    %v126 = vld [vmem:[%s125] sm:$0xf]
    %v127 = vpack.c.bf16 %v58, %v58
    %129 = vrot.lane.b32.xlu0 %v127, 32
    %v130 = vpop.permute.xlu0 %129
    %v135 = vunpack.c.l.b16 %v45
    %v136 = vunpack.c.l.b16 %v46
    %v137 = vunpack.c.l.b16 %v47
    %v138 = vunpack.c.l.b16 %v48
    %v139 = vpack.c.b16 %v136, %v135
    %v140 = vpack.c.b16 %v138, %v137
    %v144 = vsel %vm80, %v130, 0
    %146 = vmatpush.bf16.msra.mxu0 0
    %147 = vmatpush.bf16.msra.mxu0 0
    %148 = vmatpush.bf16.msra.mxu0 0
    %149 = vmatpush.bf16.msra.mxu0 0
    %150 = vmatpush.bf16.msra.mxu0 0
    %151 = vmatpush.bf16.msra.mxu0 0
    %152 = vmatpush.bf16.msra.mxu0 %v140
    %153 = vmatpush.bf16.msra.mxu0 %v139
    %154 = vmatmul.bf16.gmra.mxu0 %v144
    %v155 = vpop.f32.mrf.mxu0
    %v156 = vadd.f32 0.0, %v155
    %v157 = vpop.f32.mrf.mxu0
    %158 = vdwg.mxu0
    %v161 = vunpack.c.l.b16 %v43
    %v162 = vunpack.c.l.b16 %v44
    %v163 = vpack.c.b16 %v162, %v161
    %v166 = vsel %vm103, %v126, 0
    %168 = vmatpush.bf16.msra.mxu0 0
    %169 = vmatpush.bf16.msra.mxu0 0
    %170 = vmatpush.bf16.msra.mxu0 0
    %171 = vmatpush.bf16.msra.mxu0 0
    %172 = vmatpush.bf16.msra.mxu0 0
    %173 = vmatpush.bf16.msra.mxu0 0
    %174 = vmatpush.bf16.msra.mxu0 0
    %175 = vmatpush.bf16.msra.mxu0 %v163
    %176 = vmatmul.bf16.gmra.mxu0 %v166
    %v177 = vpop.f32.mrf.mxu0
    %v178 = vadd.f32 %v156, %v177
    %v179 = vpop.f32.mrf.mxu0
    %180 = vdwg.mxu0
    %v182 = vperm.slane %v49, 0
    %v184 = vadd.f32 %v178, %v182
    %v185 = vxor.u32 %v123, 2147483648
    %v186 = vmul.f32 %v185, 1.442695
    %v187 = vpow.pop %v186
    %v188 = vadd.f32 %v187, 1.0
    %v189 = vrcp.pop %v188
    %v190 = vmul.f32 %v188, %v189
    %v191 = vsub.f32 1.0, %v190
    %v192 = vmul.f32 %v189, %v191
    %v193 = vadd.f32 %v189, %v192
    %vm194 = vweird.f32 %v188
    %vm195 = vweird.f32 %v189
    %vm196 = vmor %vm194, %vm195
    %v197 = vsel %vm196, %v189, %v193
    %v198 = vand.u32 2147483647, %v188
    %vm199 = vcmp.eq.f32.partialorder %v198, 8.507059e+37
    %v200 = vand.u32 %v188, 2147483648
    %v201 = vor.u32 1.1754944e-38, %v200
    %v202 = vsel %vm199, %v201, %v197
    %v203 = vmul.f32 1.0, %v202
    %v204 = vtanh.pop %v123
    %v205 = vmul.f32 %v203, %v57
    %207 = vrot.lane.b32.xlu0 %v204, 64
    %v208 = vpop.permute.xlu0 %207
    %v210 = vmul.f32 %v203, %v208
    %212 = vrot.lane.b32.xlu0 %v210, 32
    %v213 = vpop.permute.xlu0 %212
    %v215 = vadd.f32 %v205, %v213
    %v216 = vtanh.pop %v215
    %218 = vrot.lane.b32.xlu0 %v216, 64
    %v219 = vpop.permute.xlu0 %218
    %v221 = vmul.f32 %v203, %v219
    %v222 = vxor.u32 %v184, 2147483648
    %v223 = vmul.f32 %v222, 1.442695
    %v224 = vpow.pop %v223
    %v225 = vadd.f32 %v224, 1.0
    %v226 = vrcp.pop %v225
    %v227 = vmul.f32 %v225, %v226
    %v228 = vsub.f32 1.0, %v227
    %v229 = vmul.f32 %v226, %v228
    %v230 = vadd.f32 %v226, %v229
    %vm231 = vweird.f32 %v225
    %vm232 = vweird.f32 %v226
    %vm233 = vmor %vm231, %vm232
    %v234 = vsel %vm233, %v226, %v230
    %v235 = vand.u32 2147483647, %v225
    %vm236 = vcmp.eq.f32.partialorder %v235, 8.507059e+37
    %v237 = vand.u32 %v225, 2147483648
    %v238 = vor.u32 1.1754944e-38, %v237
    %v239 = vsel %vm236, %v238, %v234
    %v240 = vmul.f32 1.0, %v239
    %v241 = vtanh.pop %v184
    %v242 = vmul.f32 %v240, %v59
    %244 = vrot.lane.b32.xlu0 %v241, 64
    %v245 = vpop.permute.xlu0 %244
    %v247 = vmul.f32 %v240, %v245
    %249 = vrot.lane.b32.xlu0 %v247, 32
    %v250 = vpop.permute.xlu0 %249
    %v252 = vadd.f32 %v242, %v250
    %v253 = vtanh.pop %v252
    %255 = vrot.lane.b32.xlu0 %v253, 64
    %v256 = vpop.permute.xlu0 %255
    %v258 = vmul.f32 %v240, %v256
    %v259 = vpack.c.bf16 %v221, %v221
    %261 = vrot.lane.b32.xlu0 %v259, 32
    %v262 = vpop.permute.xlu0 %261
    %s264 = smul.addr %s51, 4
    %s265 = scalar_lea.vmem %s9, %s264
    %vm266 = vcmask 257024
    %267 = vst.msk [vmem:[%s265] sm:$0xf] %vm266, %v262
    %v268 = vpack.c.bf16 %v258, %v258
    %270 = vrot.lane.b32.xlu0 %v268, 64
    %v271 = vpop.permute.xlu0 %270
    %s273 = smul.addr %s60, 4
    %s274 = scalar_lea.vmem %s9, %s273
    %vm275 = vcmask 519424
    %276 = vst.msk [vmem:[%s274] sm:$0xf] %vm275, %v271
  $region42: #{seq2seq_forward.2} parent=0 // loop_footer
    %s55 = sadd.s32 1, %s51
  $region43: #{seq2seq_forward.2} parent=0 // loop_footer_branch
    %50 = sbr.rel target = $region39
  $region44: #{seq2seq_forward.2} parent=0 // loop_exit
    _
  %v277 = vld [vmem:[%s7] sm:$0xf]
  %v278 = vld [vmem:[%s7 + $0x4] sm:$0xf]
  %v279 = vld [vmem:[%s7 + $0x8] sm:$0xf]
  %v280 = vld [vmem:[%s7 + $0xc] sm:$0xf]
  %v281 = vld [vmem:[%s7 + $0x10] sm:$0xf]
  %v282 = vld [vmem:[%s7 + $0x14] sm:$0xf]
  %v283 = vld [vmem:[%s7 + $0x18] sm:$0xf]
  %v284 = vld [vmem:[%s7 + $0x1c] sm:$0xf]
  %v285 = vld [vmem:[%s8] sm:$0x1]
  %v286 = vpack.c.bf16 %v56, %v56
  %v287 = vpack.c.bf16 %v58, %v58
  %289 = vrot.lane.b32.xlu0 %v287, 32
  %v290 = vpop.permute.xlu0 %289
  %v295 = vunpack.c.l.b16 %v281
  %v296 = vunpack.c.l.b16 %v282
  %v297 = vunpack.c.l.b16 %v283
  %v298 = vunpack.c.l.b16 %v284
  %v299 = vpack.c.b16 %v296, %v295
  %v300 = vpack.c.b16 %v298, %v297
  %vm303 = vcmask 261120
  %v305 = vsel %vm303, %v290, 0
  %307 = vmatpush.bf16.msra.mxu0 0
  %308 = vmatpush.bf16.msra.mxu0 0
  %309 = vmatpush.bf16.msra.mxu0 0
  %310 = vmatpush.bf16.msra.mxu0 0
  %311 = vmatpush.bf16.msra.mxu0 0
  %312 = vmatpush.bf16.msra.mxu0 0
  %313 = vmatpush.bf16.msra.mxu0 %v300
  %314 = vmatpush.bf16.msra.mxu0 %v299
  %315 = vmatmul.bf16.gmra.mxu0 %v305
  %v316 = vpop.f32.mrf.mxu0
  %v317 = vadd.f32 0.0, %v316
  %v318 = vpop.f32.mrf.mxu0
  %319 = vdwg.mxu0
  %321 = vrot.lane.b32.xlu0 %v286, 32
  %v322 = vpop.permute.xlu0 %321
  %v327 = vunpack.c.l.b16 %v277
  %v328 = vunpack.c.l.b16 %v278
  %v329 = vunpack.c.l.b16 %v279
  %v330 = vunpack.c.l.b16 %v280
  %v331 = vpack.c.b16 %v328, %v327
  %v332 = vpack.c.b16 %v330, %v329
  %v336 = vsel %vm303, %v322, 0
  %338 = vmatpush.bf16.msra.mxu0 0
  %339 = vmatpush.bf16.msra.mxu0 0
  %340 = vmatpush.bf16.msra.mxu0 0
  %341 = vmatpush.bf16.msra.mxu0 0
  %342 = vmatpush.bf16.msra.mxu0 0
  %343 = vmatpush.bf16.msra.mxu0 0
  %344 = vmatpush.bf16.msra.mxu0 %v332
  %345 = vmatpush.bf16.msra.mxu0 %v331
  %346 = vmatmul.bf16.gmra.mxu0 %v336
  %v347 = vpop.f32.mrf.mxu0
  %v348 = vadd.f32 %v317, %v347
  %v349 = vpop.f32.mrf.mxu0
  %350 = vdwg.mxu0
  %v352 = vperm.slane %v285, 0
  %v354 = vadd.f32 %v348, %v352
  %355 = vst.msk [vmem:[%s10] sm:$0xff] %vm303, %v354
  %v356 = vpack.c.bf16 %v57, %v57
  %v357 = vpack.c.bf16 %v59, %v59
  %359 = vrot.lane.b32.xlu0 %v357, 96
  %v360 = vpop.permute.xlu0 %359
  %v362 = vsel %vm303, %v360, 0
  %364 = vmatpush.bf16.msra.mxu0 0
  %365 = vmatpush.bf16.msra.mxu0 0
  %366 = vmatpush.bf16.msra.mxu0 0
  %367 = vmatpush.bf16.msra.mxu0 0
  %368 = vmatpush.bf16.msra.mxu0 0
  %369 = vmatpush.bf16.msra.mxu0 0
  %370 = vmatpush.bf16.msra.mxu0 %v300
  %371 = vmatpush.bf16.msra.mxu0 %v299
  %372 = vmatmul.bf16.gmra.mxu0 %v362
  %v373 = vpop.f32.mrf.mxu0
  %v374 = vadd.f32 0.0, %v373
  %v375 = vpop.f32.mrf.mxu0
  %376 = vdwg.mxu0
  %378 = vrot.lane.b32.xlu0 %v356, 96
  %v379 = vpop.permute.xlu0 %378
  %v381 = vsel %vm303, %v379, 0
  %383 = vmatpush.bf16.msra.mxu0 0
  %384 = vmatpush.bf16.msra.mxu0 0
  %385 = vmatpush.bf16.msra.mxu0 0
  %386 = vmatpush.bf16.msra.mxu0 0
  %387 = vmatpush.bf16.msra.mxu0 0
  %388 = vmatpush.bf16.msra.mxu0 0
  %389 = vmatpush.bf16.msra.mxu0 %v332
  %390 = vmatpush.bf16.msra.mxu0 %v331
  %391 = vmatmul.bf16.gmra.mxu0 %v381
  %v392 = vpop.f32.mrf.mxu0
  %v393 = vadd.f32 %v374, %v392
  %v394 = vpop.f32.mrf.mxu0
  %395 = vdwg.mxu0
  %v396 = vadd.f32 %v393, %v352
  %397 = vst.msk [vmem:[%s11] sm:$0xff] %vm303, %v396
  // Predicated region
  $region45: #{seq2seq_forward.2} parent=0 // pred_check
    _
  $region46: #{seq2seq_forward.2} parent=0 // pred_check_branch
    %399 = sbr.rel (0) target = $region48
  $region47: #{seq2seq_forward.2} parent=0 // pred_region
    _
  $region48: #{seq2seq_forward.2} parent=0 // pred_fallthru
    _
  // Predicated region
  $region49: #{seq2seq_forward.2} parent=0 // pred_check
    _
  $region50: #{seq2seq_forward.2} parent=0 // pred_check_branch
    %401 = sbr.rel (0) target = $region52
  $region51: #{seq2seq_forward.2} parent=0 // pred_region
    _
  $region52: #{seq2seq_forward.2} parent=0 // pred_fallthru
    _
  // Predicated region
  $region53: #{seq2seq_forward.2} parent=0 // pred_check
    _
  $region54: #{seq2seq_forward.2} parent=0 // pred_check_branch
    %403 = sbr.rel (0) target = $region56
  $region55: #{seq2seq_forward.2} parent=0 // pred_region
    _
  $region56: #{seq2seq_forward.2} parent=0 // pred_fallthru
    _
  // Predicated region
  $region57: #{seq2seq_forward.2} parent=0 // pred_check
    _
  $region58: #{seq2seq_forward.2} parent=0 // pred_check_branch
    %405 = sbr.rel (0) target = $region60
  $region59: #{seq2seq_forward.2} parent=0 // pred_region
    _
  $region60: #{seq2seq_forward.2} parent=0 // pred_fallthru
    _
  // Predicated region
  $region61: #{seq2seq_forward.2} parent=0 // pred_check
    _
  $region62: #{seq2seq_forward.2} parent=0 // pred_check_branch
    %407 = sbr.rel (0) target = $region64
  $region63: #{seq2seq_forward.2} parent=0 // pred_region
    _
  $region64: #{seq2seq_forward.2} parent=0 // pred_fallthru
    _
  // Predicated region
  $region65: #{seq2seq_forward.2} parent=0 // pred_check
    _
  $region66: #{seq2seq_forward.2} parent=0 // pred_check_branch
    %409 = sbr.rel (0) target = $region68
  $region67: #{seq2seq_forward.2} parent=0 // pred_region
    _
  $region68: #{seq2seq_forward.2} parent=0 // pred_fallthru
    _

// kernel: seq2seq_forward.3
$region0: #{seq2seq_forward.3}
  #allocation0 [shape = 'u32[]', space=smem, size = 0x4, offset = 0x4, fixed_abs, tag = 'smem constant byte address 0x4 - core index']
  #allocation1 [shape = 'u32[72,128]{1,0:T(1,128)}', space=vmem, size = 0x9000, scoped, tag = 'internal scratch']
  #allocation2 [shape = 'f32[8,32]{1,0:T(8,128)}', space=vmem, size = 0x1000, scoped, tag = 'scratch operand']
  #allocation3 [shape = 'f32[8,32]{1,0:T(8,128)}', space=vmem, size = 0x1000, scoped, tag = 'scratch operand']
  #allocation4 [shape = 'bf16[4,8,32]{2,1,0:T(8,128)(2,1)}', space=vmem, size = 0x2000, scoped, tag = 'scratch operand']
  %s0 = inlined_call_operand.vmem [shape: bf16[8,8,16], index: 0, kind: input, shape index: {}]
  %s1 = inlined_call_operand.vmem [shape: bf16[8,8,64], index: 1, kind: input, shape index: {}]
  %s2 = inlined_call_operand.vmem [shape: f32[8,8], index: 2, kind: input, shape index: {}]
  %s3 = inlined_call_operand.vmem [shape: f32[1,32], index: 3, kind: input, shape index: {}]
  %s4 = inlined_call_operand.vmem [shape: bf16[64,128], index: 4, kind: input, shape index: {}]
  %s5 = inlined_call_operand.vmem [shape: bf16[16,128], index: 5, kind: input, shape index: {}]
  %s6 = inlined_call_operand.vmem [shape: bf16[32,128], index: 6, kind: input, shape index: {}]
  %s7 = inlined_call_operand.vmem [shape: f32[1,128], index: 7, kind: input, shape index: {}]
  %s8 = inlined_call_operand.vmem [shape: bf16[32,128], index: 8, kind: input, shape index: {}]
  %s9 = inlined_call_operand.vmem [shape: f32[1,128], index: 9, kind: input, shape index: {}]
  %s10 = inlined_call_operand.vmem [shape: f32[8,32], index: 10, kind: input, shape index: {}]
  %s11 = inlined_call_operand.vmem [shape: f32[8,32], index: 11, kind: input, shape index: {}]
  %s12 = inlined_call_operand.vmem [shape: bf16[8,8,128], index: 12, kind: output, shape index: {}]
  %s13 = sld [smem:[#allocation0]]
  $region92: #{seq2seq_forward.3} parent=0
    _
  %s15 = ssub.s32 1, %s13
  %s16 = scalar_select 0, %s15, %s13
  loop: start=0, step=1, limit=4
  $region2: #{seq2seq_forward.3} parent=0 // loop_pre_header
    _
  $region3: #{seq2seq_forward.3} parent=0 // loop_header
    %s18 = sphi 0, %s22
    %p19 = scmp.ge.s32.totalorder %s18, 4
    %s28 = sphi 0, %s30
    %s31 = sphi 0, %s28
    %s32 = sphi 0, %s31
    %s48 = sphi 0, %s32
    %s52 = sphi 0, %s52
    %s54 = sphi 0, %s52
    %s55 = sphi 0, %s54
    %s69 = sphi 0, %s55
    %s73 = sphi 0, %s73
    %s75 = sphi 0, %s73
    %s76 = sphi 0, %s75
    %s90 = sphi 0, %s76
    %s94 = sphi 0, %s94
    %s96 = sphi 0, %s94
    %s97 = sphi 0, %s96
    %s111 = sphi 0, %s97
    %s115 = sphi 0, %s115
    %s117 = sphi 0, %s115
    %s118 = sphi 0, %s117
    %s132 = sphi 0, %s118
    %s136 = sphi 0, %s136
    %s138 = sphi 0, %s136
    %s139 = sphi 0, %s138
    %s153 = sphi 0, %s139
    %s157 = sphi 0, %s157
    %s159 = sphi 0, %s157
    %s160 = sphi 0, %s159
    %s174 = sphi 0, %s160
    %s178 = sphi 0, %s178
    %s180 = sphi 0, %s178
    %s181 = sphi 0, %s180
    %s195 = sphi 0, %s181
    %s199 = sphi 0, %s199
    %s201 = sphi 0, %s199
    %s202 = sphi 0, %s201
    %s216 = sphi 0, %s202
    %s220 = sphi 0, %s220
    %s222 = sphi 0, %s220
    %s223 = sphi 0, %s222
    %s237 = sphi 0, %s223
    %s241 = sphi 0, %s241
    %s243 = sphi 0, %s241
    %s244 = sphi 0, %s243
    %s258 = sphi 0, %s244
    %s262 = sphi 0, %s262
    %s264 = sphi 0, %s262
    %s265 = sphi 0, %s264
    %s279 = sphi 0, %s265
    %s285 = sphi 0, %s287
    %s288 = sphi 0, %s285
    %s289 = sphi 0, %s288
    %s305 = sphi 0, %s289
  $region4: #{seq2seq_forward.3} parent=0 // loop_header_branch
    %21 = sbr.rel (%p19) target = $region8
  $region5: #{seq2seq_forward.3} parent=0 // loop_body
    %s23 = ssub.s32 %s18, 1
    %s24 = ssub.s32 %s18, 2
    %s25 = sadd.s32 %s18, 1
    %s26 = ssub.s32 %s18, %s25
    %p27 = scmp.eq.s32.totalorder %s26, 0
    %s29 = sadd.s32 %s28, 1
    %s30 = scalar_select %p27, %s28, %s29
    %p33 = pneg %p27
    %p34 = scmp.eq.s32.totalorder %s18, 1
    %p35 = por %p33, %p34
    %p36 = scmp.ne.s32.totalorder %s28, %s31
    %p37 = scmp.eq.s32.totalorder %s18, 0
    %p38 = por %p36, %p37
    %p39 = scmp.ne.s32.totalorder %s28, %s31
    %p40 = scmp.eq.s32.totalorder %s23, 1
    %p41 = por %p39, %p40
    %p42 = scmp.ne.s32.totalorder %s31, %s32
    %p43 = scmp.eq.s32.totalorder %s23, 0
    %p44 = por %p42, %p43
    %p45 = scmp.ne.s32.totalorder %s31, %s32
    %p46 = scmp.eq.s32.totalorder %s24, 1
    %p47 = por %p45, %p46
    %p49 = scmp.ne.s32.totalorder %s32, %s48
    %p50 = scmp.eq.s32.totalorder %s24, 0
    %p51 = por %p49, %p50
    %s53 = sadd.s32 %s52, 1
    %p56 = scmp.eq.s32.totalorder %s18, 1
    %p57 = scmp.ne.s32.totalorder %s52, %s54
    %p58 = scmp.eq.s32.totalorder %s18, 0
    %p59 = por %p57, %p58
    %p60 = scmp.ne.s32.totalorder %s52, %s54
    %p61 = scmp.eq.s32.totalorder %s23, 1
    %p62 = por %p60, %p61
    %p63 = scmp.ne.s32.totalorder %s54, %s55
    %p64 = scmp.eq.s32.totalorder %s23, 0
    %p65 = por %p63, %p64
    %p66 = scmp.ne.s32.totalorder %s54, %s55
    %p67 = scmp.eq.s32.totalorder %s24, 1
    %p68 = por %p66, %p67
    %p70 = scmp.ne.s32.totalorder %s55, %s69
    %p71 = scmp.eq.s32.totalorder %s24, 0
    %p72 = por %p70, %p71
    %s74 = sadd.s32 %s73, 1
    %p77 = scmp.eq.s32.totalorder %s18, 1
    %p78 = scmp.ne.s32.totalorder %s73, %s75
    %p79 = scmp.eq.s32.totalorder %s18, 0
    %p80 = por %p78, %p79
    %p81 = scmp.ne.s32.totalorder %s73, %s75
    %p82 = scmp.eq.s32.totalorder %s23, 1
    %p83 = por %p81, %p82
    %p84 = scmp.ne.s32.totalorder %s75, %s76
    %p85 = scmp.eq.s32.totalorder %s23, 0
    %p86 = por %p84, %p85
    %p87 = scmp.ne.s32.totalorder %s75, %s76
    %p88 = scmp.eq.s32.totalorder %s24, 1
    %p89 = por %p87, %p88
    %p91 = scmp.ne.s32.totalorder %s76, %s90
    %p92 = scmp.eq.s32.totalorder %s24, 0
    %p93 = por %p91, %p92
    %s95 = sadd.s32 %s94, 1
    %p98 = scmp.eq.s32.totalorder %s18, 1
    %p99 = scmp.ne.s32.totalorder %s94, %s96
    %p100 = scmp.eq.s32.totalorder %s18, 0
    %p101 = por %p99, %p100
    %p102 = scmp.ne.s32.totalorder %s94, %s96
    %p103 = scmp.eq.s32.totalorder %s23, 1
    %p104 = por %p102, %p103
    %p105 = scmp.ne.s32.totalorder %s96, %s97
    %p106 = scmp.eq.s32.totalorder %s23, 0
    %p107 = por %p105, %p106
    %p108 = scmp.ne.s32.totalorder %s96, %s97
    %p109 = scmp.eq.s32.totalorder %s24, 1
    %p110 = por %p108, %p109
    %p112 = scmp.ne.s32.totalorder %s97, %s111
    %p113 = scmp.eq.s32.totalorder %s24, 0
    %p114 = por %p112, %p113
    %s116 = sadd.s32 %s115, 1
    %p119 = scmp.eq.s32.totalorder %s18, 1
    %p120 = scmp.ne.s32.totalorder %s115, %s117
    %p121 = scmp.eq.s32.totalorder %s18, 0
    %p122 = por %p120, %p121
    %p123 = scmp.ne.s32.totalorder %s115, %s117
    %p124 = scmp.eq.s32.totalorder %s23, 1
    %p125 = por %p123, %p124
    %p126 = scmp.ne.s32.totalorder %s117, %s118
    %p127 = scmp.eq.s32.totalorder %s23, 0
    %p128 = por %p126, %p127
    %p129 = scmp.ne.s32.totalorder %s117, %s118
    %p130 = scmp.eq.s32.totalorder %s24, 1
    %p131 = por %p129, %p130
    %p133 = scmp.ne.s32.totalorder %s118, %s132
    %p134 = scmp.eq.s32.totalorder %s24, 0
    %p135 = por %p133, %p134
    %s137 = sadd.s32 %s136, 1
    %p140 = scmp.eq.s32.totalorder %s18, 1
    %p141 = scmp.ne.s32.totalorder %s136, %s138
    %p142 = scmp.eq.s32.totalorder %s18, 0
    %p143 = por %p141, %p142
    %p144 = scmp.ne.s32.totalorder %s136, %s138
    %p145 = scmp.eq.s32.totalorder %s23, 1
    %p146 = por %p144, %p145
    %p147 = scmp.ne.s32.totalorder %s138, %s139
    %p148 = scmp.eq.s32.totalorder %s23, 0
    %p149 = por %p147, %p148
    %p150 = scmp.ne.s32.totalorder %s138, %s139
    %p151 = scmp.eq.s32.totalorder %s24, 1
    %p152 = por %p150, %p151
    %p154 = scmp.ne.s32.totalorder %s139, %s153
    %p155 = scmp.eq.s32.totalorder %s24, 0
    %p156 = por %p154, %p155
    %s158 = sadd.s32 %s157, 1
    %p161 = scmp.eq.s32.totalorder %s18, 1
    %p162 = scmp.ne.s32.totalorder %s157, %s159
    %p163 = scmp.eq.s32.totalorder %s18, 0
    %p164 = por %p162, %p163
    %p165 = scmp.ne.s32.totalorder %s157, %s159
    %p166 = scmp.eq.s32.totalorder %s23, 1
    %p167 = por %p165, %p166
    %p168 = scmp.ne.s32.totalorder %s159, %s160
    %p169 = scmp.eq.s32.totalorder %s23, 0
    %p170 = por %p168, %p169
    %p171 = scmp.ne.s32.totalorder %s159, %s160
    %p172 = scmp.eq.s32.totalorder %s24, 1
    %p173 = por %p171, %p172
    %p175 = scmp.ne.s32.totalorder %s160, %s174
    %p176 = scmp.eq.s32.totalorder %s24, 0
    %p177 = por %p175, %p176
    %s179 = sadd.s32 %s178, 1
    %p182 = scmp.eq.s32.totalorder %s18, 1
    %p183 = scmp.ne.s32.totalorder %s178, %s180
    %p184 = scmp.eq.s32.totalorder %s18, 0
    %p185 = por %p183, %p184
    %p186 = scmp.ne.s32.totalorder %s178, %s180
    %p187 = scmp.eq.s32.totalorder %s23, 1
    %p188 = por %p186, %p187
    %p189 = scmp.ne.s32.totalorder %s180, %s181
    %p190 = scmp.eq.s32.totalorder %s23, 0
    %p191 = por %p189, %p190
    %p192 = scmp.ne.s32.totalorder %s180, %s181
    %p193 = scmp.eq.s32.totalorder %s24, 1
    %p194 = por %p192, %p193
    %p196 = scmp.ne.s32.totalorder %s181, %s195
    %p197 = scmp.eq.s32.totalorder %s24, 0
    %p198 = por %p196, %p197
    %s200 = sadd.s32 %s199, 1
    %p203 = scmp.eq.s32.totalorder %s18, 1
    %p204 = scmp.ne.s32.totalorder %s199, %s201
    %p205 = scmp.eq.s32.totalorder %s18, 0
    %p206 = por %p204, %p205
    %p207 = scmp.ne.s32.totalorder %s199, %s201
    %p208 = scmp.eq.s32.totalorder %s23, 1
    %p209 = por %p207, %p208
    %p210 = scmp.ne.s32.totalorder %s201, %s202
    %p211 = scmp.eq.s32.totalorder %s23, 0
    %p212 = por %p210, %p211
    %p213 = scmp.ne.s32.totalorder %s201, %s202
    %p214 = scmp.eq.s32.totalorder %s24, 1
    %p215 = por %p213, %p214
    %p217 = scmp.ne.s32.totalorder %s202, %s216
    %p218 = scmp.eq.s32.totalorder %s24, 0
    %p219 = por %p217, %p218
    %s221 = sadd.s32 %s220, 1
    %p224 = scmp.eq.s32.totalorder %s18, 1
    %p225 = scmp.ne.s32.totalorder %s220, %s222
    %p226 = scmp.eq.s32.totalorder %s18, 0
    %p227 = por %p225, %p226
    %p228 = scmp.ne.s32.totalorder %s220, %s222
    %p229 = scmp.eq.s32.totalorder %s23, 1
    %p230 = por %p228, %p229
    %p231 = scmp.ne.s32.totalorder %s222, %s223
    %p232 = scmp.eq.s32.totalorder %s23, 0
    %p233 = por %p231, %p232
    %p234 = scmp.ne.s32.totalorder %s222, %s223
    %p235 = scmp.eq.s32.totalorder %s24, 1
    %p236 = por %p234, %p235
    %p238 = scmp.ne.s32.totalorder %s223, %s237
    %p239 = scmp.eq.s32.totalorder %s24, 0
    %p240 = por %p238, %p239
    %s242 = sadd.s32 %s241, 1
    %p245 = scmp.eq.s32.totalorder %s18, 1
    %p246 = scmp.ne.s32.totalorder %s241, %s243
    %p247 = scmp.eq.s32.totalorder %s18, 0
    %p248 = por %p246, %p247
    %p249 = scmp.ne.s32.totalorder %s241, %s243
    %p250 = scmp.eq.s32.totalorder %s23, 1
    %p251 = por %p249, %p250
    %p252 = scmp.ne.s32.totalorder %s243, %s244
    %p253 = scmp.eq.s32.totalorder %s23, 0
    %p254 = por %p252, %p253
    %p255 = scmp.ne.s32.totalorder %s243, %s244
    %p256 = scmp.eq.s32.totalorder %s24, 1
    %p257 = por %p255, %p256
    %p259 = scmp.ne.s32.totalorder %s244, %s258
    %p260 = scmp.eq.s32.totalorder %s24, 0
    %p261 = por %p259, %p260
    %s263 = sadd.s32 %s262, 1
    %p266 = scmp.eq.s32.totalorder %s18, 1
    %p267 = scmp.ne.s32.totalorder %s262, %s264
    %p268 = scmp.eq.s32.totalorder %s18, 0
    %p269 = por %p267, %p268
    %p270 = scmp.ne.s32.totalorder %s262, %s264
    %p271 = scmp.eq.s32.totalorder %s23, 1
    %p272 = por %p270, %p271
    %p273 = scmp.ne.s32.totalorder %s264, %s265
    %p274 = scmp.eq.s32.totalorder %s23, 0
    %p275 = por %p273, %p274
    %p276 = scmp.ne.s32.totalorder %s264, %s265
    %p277 = scmp.eq.s32.totalorder %s24, 1
    %p278 = por %p276, %p277
    %p280 = scmp.ne.s32.totalorder %s265, %s279
    %p281 = scmp.eq.s32.totalorder %s24, 0
    %p282 = por %p280, %p281
    %s283 = ssub.s32 %s18, %s25
    %p284 = scmp.eq.s32.totalorder %s283, 0
    %s286 = sadd.s32 %s285, 1
    %s287 = scalar_select %p284, %s285, %s286
    %p290 = pneg %p284
    %p291 = scmp.eq.s32.totalorder %s18, 1
    %p292 = por %p290, %p291
    %p293 = scmp.ne.s32.totalorder %s285, %s288
    %p294 = scmp.eq.s32.totalorder %s18, 0
    %p295 = por %p293, %p294
    %p296 = scmp.ne.s32.totalorder %s285, %s288
    %p297 = scmp.eq.s32.totalorder %s23, 1
    %p298 = por %p296, %p297
    %p299 = scmp.ne.s32.totalorder %s288, %s289
    %p300 = scmp.eq.s32.totalorder %s23, 0
    %p301 = por %p299, %p300
    %p302 = scmp.ne.s32.totalorder %s288, %s289
    %p303 = scmp.eq.s32.totalorder %s24, 1
    %p304 = por %p302, %p303
    %p306 = scmp.ne.s32.totalorder %s289, %s305
    %p307 = scmp.eq.s32.totalorder %s24, 0
    %p308 = por %p306, %p307
    %p309 = scmp.le.s32.totalorder 1, %s18
    %p310 = scmp.lt.s32.totalorder %s18, 3
    %p311 = pnand %p309, %p310
    %p312 = pneg %p311
    // Predicated region
    $region9: #{seq2seq_forward.3} parent=5 // pred_check
      _
    $region10: #{seq2seq_forward.3} parent=5 // pred_check_branch
      %314 = sbr.rel (%p311) target = $region12
    $region11: #{seq2seq_forward.3} parent=5 // pred_region
      %s315 = ssub.s32 %s18, 1
      // Predicated region
      $region13: #{seq2seq_forward.3} parent=11 // pred_check
        %p316 = pneg %p65
      $region14: #{seq2seq_forward.3} parent=11 // pred_check_branch
        %318 = sbr.rel (%p316) target = $region16
      $region15: #{seq2seq_forward.3} parent=11 // pred_region
        _
      $region16: #{seq2seq_forward.3} parent=11 // pred_fallthru
        _
      // Predicated region
      $region17: #{seq2seq_forward.3} parent=11 // pred_check
        %p319 = pneg %p86
      $region18: #{seq2seq_forward.3} parent=11 // pred_check_branch
        %321 = sbr.rel (%p319) target = $region20
      $region19: #{seq2seq_forward.3} parent=11 // pred_region
        _
      $region20: #{seq2seq_forward.3} parent=11 // pred_fallthru
        _
      // Predicated region
      $region21: #{seq2seq_forward.3} parent=11 // pred_check
        %p322 = pneg %p107
      $region22: #{seq2seq_forward.3} parent=11 // pred_check_branch
        %324 = sbr.rel (%p322) target = $region24
      $region23: #{seq2seq_forward.3} parent=11 // pred_region
        _
      $region24: #{seq2seq_forward.3} parent=11 // pred_fallthru
        _
      // Predicated region
      $region25: #{seq2seq_forward.3} parent=11 // pred_check
        %p325 = pneg %p128
      $region26: #{seq2seq_forward.3} parent=11 // pred_check_branch
        %327 = sbr.rel (%p325) target = $region28
      $region27: #{seq2seq_forward.3} parent=11 // pred_region
        _
      $region28: #{seq2seq_forward.3} parent=11 // pred_fallthru
        _
      // Predicated region
      $region29: #{seq2seq_forward.3} parent=11 // pred_check
        %p328 = pneg %p149
      $region30: #{seq2seq_forward.3} parent=11 // pred_check_branch
        %330 = sbr.rel (%p328) target = $region32
      $region31: #{seq2seq_forward.3} parent=11 // pred_region
        _
      $region32: #{seq2seq_forward.3} parent=11 // pred_fallthru
        _
      // Predicated region
      $region33: #{seq2seq_forward.3} parent=11 // pred_check
        %p331 = pneg %p170
      $region34: #{seq2seq_forward.3} parent=11 // pred_check_branch
        %333 = sbr.rel (%p331) target = $region36
      $region35: #{seq2seq_forward.3} parent=11 // pred_region
        _
      $region36: #{seq2seq_forward.3} parent=11 // pred_fallthru
        _
      // Predicated region
      $region37: #{seq2seq_forward.3} parent=11 // pred_check
        %p334 = pneg %p191
      $region38: #{seq2seq_forward.3} parent=11 // pred_check_branch
        %336 = sbr.rel (%p334) target = $region40
      $region39: #{seq2seq_forward.3} parent=11 // pred_region
        _
      $region40: #{seq2seq_forward.3} parent=11 // pred_fallthru
        _
      // Predicated region
      $region41: #{seq2seq_forward.3} parent=11 // pred_check
        %p337 = pneg %p212
      $region42: #{seq2seq_forward.3} parent=11 // pred_check_branch
        %339 = sbr.rel (%p337) target = $region44
      $region43: #{seq2seq_forward.3} parent=11 // pred_region
        _
      $region44: #{seq2seq_forward.3} parent=11 // pred_fallthru
        _
      // Predicated region
      $region45: #{seq2seq_forward.3} parent=11 // pred_check
        %p340 = pneg %p233
      $region46: #{seq2seq_forward.3} parent=11 // pred_check_branch
        %342 = sbr.rel (%p340) target = $region48
      $region47: #{seq2seq_forward.3} parent=11 // pred_region
        _
      $region48: #{seq2seq_forward.3} parent=11 // pred_fallthru
        _
      // Predicated region
      $region49: #{seq2seq_forward.3} parent=11 // pred_check
        %p343 = pneg %p254
      $region50: #{seq2seq_forward.3} parent=11 // pred_check_branch
        %345 = sbr.rel (%p343) target = $region52
      $region51: #{seq2seq_forward.3} parent=11 // pred_region
        _
      $region52: #{seq2seq_forward.3} parent=11 // pred_fallthru
        _
      // Predicated region
      $region53: #{seq2seq_forward.3} parent=11 // pred_check
        %p346 = pneg %p275
      $region54: #{seq2seq_forward.3} parent=11 // pred_check_branch
        %348 = sbr.rel (%p346) target = $region56
      $region55: #{seq2seq_forward.3} parent=11 // pred_region
        _
      $region56: #{seq2seq_forward.3} parent=11 // pred_fallthru
        _
    $region12: #{seq2seq_forward.3} parent=5 // pred_fallthru
      _
    %p349 = scmp.lt.s32.totalorder %s18, 2
    // Predicated region
    $region57: #{seq2seq_forward.3} parent=5 // pred_check
      %p350 = pneg %p349
    $region58: #{seq2seq_forward.3} parent=5 // pred_check_branch
      %352 = sbr.rel (%p350) target = $region60
    $region59: #{seq2seq_forward.3} parent=5 // pred_region
      // Predicated region
      $region61: #{seq2seq_forward.3} parent=59 // pred_check
        %p353 = pneg %p38
      $region62: #{seq2seq_forward.3} parent=59 // pred_check_branch
        %355 = sbr.rel (%p353) target = $region64
      $region63: #{seq2seq_forward.3} parent=59 // pred_region
        %s356 = smul.u32 4, %s18
        %p357 = scmp.lt.s32.totalorder %s356, 7
        %s358 = scalar_select %p357, %s356, 7
        %s359 = smul.addr %s358, 4
        %s360 = scalar_lea.vmem %s0, %s359
        %s361 = smul.u32 4, %s18
      $region64: #{seq2seq_forward.3} parent=59 // pred_fallthru
        _
    $region60: #{seq2seq_forward.3} parent=5 // pred_fallthru
      _
    %p362 = scmp.le.s32.totalorder 1, %s18
    %p363 = scmp.lt.s32.totalorder %s18, 3
    %p364 = pnand %p362, %p363
    %p365 = pneg %p364
    // Predicated region
    $region65: #{seq2seq_forward.3} parent=5 // pred_check
      _
    $region66: #{seq2seq_forward.3} parent=5 // pred_check_branch
      %367 = sbr.rel (%p364) target = $region68
    $region67: #{seq2seq_forward.3} parent=5 // pred_region
      %s368 = ssub.s32 %s18, 1
      %s369 = smul.u32 4, %s23
      %p370 = scmp.lt.s32.totalorder %s369, 7
      %s371 = scalar_select %p370, %s369, 7
      %s372 = smul.addr %s371, 4
      %s373 = scalar_lea.vmem %s0, %s372
      %p374 = pneg %p44
      %p375 = pneg %p41
      %p376 = pneg %p65
      %p377 = pneg %p62
      %p378 = pneg %p86
      %p379 = pneg %p83
      %p380 = pneg %p107
      %p381 = pneg %p104
      %p382 = pneg %p128
      %p383 = pneg %p125
      %p384 = pneg %p149
      %p385 = pneg %p146
      %p386 = pneg %p170
      %p387 = pneg %p167
      %p388 = pneg %p191
      %p389 = pneg %p188
      %p390 = pneg %p212
      %p391 = pneg %p209
      %p392 = pneg %p233
      %p393 = pneg %p230
      %p394 = pneg %p254
      %p395 = pneg %p251
      %p396 = pneg %p275
      %p397 = pneg %p272
      %p398 = pneg %p301
      %p399 = pneg %p298
      %s400 = smul.u32 4, %s23
      %p401 = scmp.lt.s32.totalorder %s400, 7
      %s402 = scalar_select %p401, %s400, 7
      %s403 = smul.addr %s402, 4
      %s404 = scalar_lea.vmem %s12, %s403
      %s405 = smul.u32 4, %s23
      %p406 = scmp.lt.s32.totalorder %s405, 7
      %s407 = scalar_select %p406, %s405, 7
      %s408 = smul.addr %s407, 4
      %s409 = scalar_lea.vmem %s0, %s408
      %s410 = smul.u32 4, %s23
      %s411 = smul.u32 4, %s23
      %p412 = scmp.lt.s32.totalorder %s411, 7
      %s413 = scalar_select %p412, %s411, 7
      %s414 = smul.addr %s413, 4
      %s415 = scalar_lea.vmem %s12, %s414
      %s416 = smul.u32 4, %s23
      %p418 = scmp.eq.s32.totalorder %s23, 0
      // Predicated region
      $region69: #{seq2seq_forward.3} parent=67 // pred_check
        %p419 = pneg %p418
      $region70: #{seq2seq_forward.3} parent=67 // pred_check_branch
        %421 = sbr.rel (%p419) target = $region72
      $region71: #{seq2seq_forward.3} parent=67 // pred_region
        %v422 = vld [vmem:[%s10] sm:$0xff]
        %vm423 = vcmask 261120
        %424 = vst.msk [vmem:[#allocation2] sm:$0xff] %vm423, %v422
        %v425 = vld [vmem:[%s11] sm:$0xff]
        %426 = vst.msk [vmem:[#allocation3] sm:$0xff] %vm423, %v425
      $region72: #{seq2seq_forward.3} parent=67 // pred_fallthru
        _
      %v427 = vld [vmem:[%s1] sm:$0xf]
      %v428 = vld [vmem:[%s1 + $0x4] sm:$0xf]
      %v429 = vld [vmem:[%s1 + $0x8] sm:$0xf]
      %v430 = vld [vmem:[%s1 + $0xc] sm:$0xf]
      %v431 = vld [vmem:[%s1 + $0x10] sm:$0xf]
      %v432 = vld [vmem:[%s1 + $0x14] sm:$0xf]
      %v433 = vld [vmem:[%s1 + $0x18] sm:$0xf]
      %v434 = vld [vmem:[%s1 + $0x1c] sm:$0xf]
      %v435 = vld [vmem:[%s2] sm:$0xff]
      %v436 = vld [vmem:[%s3] sm:$0x1]
      %v437 = vld [vmem:[%s4] sm:$0xf]
      %v438 = vld [vmem:[%s4 + $0x4] sm:$0xf]
      %v439 = vld [vmem:[%s4 + $0x8] sm:$0xf]
      %v440 = vld [vmem:[%s4 + $0xc] sm:$0xf]
      %v441 = vld [vmem:[%s4 + $0x10] sm:$0xf]
      %v442 = vld [vmem:[%s4 + $0x14] sm:$0xf]
      %v443 = vld [vmem:[%s4 + $0x18] sm:$0xf]
      %v444 = vld [vmem:[%s4 + $0x1c] sm:$0xf]
      %v445 = vld [vmem:[%s5] sm:$0xf]
      %v446 = vld [vmem:[%s5 + $0x4] sm:$0xf]
      %v447 = vld [vmem:[%s6] sm:$0xf]
      %v448 = vld [vmem:[%s6 + $0x4] sm:$0xf]
      %v449 = vld [vmem:[%s6 + $0x8] sm:$0xf]
      %v450 = vld [vmem:[%s6 + $0xc] sm:$0xf]
      %v451 = vld [vmem:[%s7] sm:$0x1]
      %v452 = vld [vmem:[#allocation2] sm:$0xff]
      %v453 = vld [vmem:[#allocation3] sm:$0xff]
      loop: start=0, step=1, limit=4
      $region73: #{seq2seq_forward.3} parent=67 // loop_pre_header
        _
      $region74: #{seq2seq_forward.3} parent=67 // loop_header
        %s455 = sphi 0, %s459
        %p456 = scmp.ge.s32.totalorder %s455, 4
        %v460 = vphi %v452, %v877
        %v461 = vphi %v453, %v881
      $region75: #{seq2seq_forward.3} parent=67 // loop_header_branch
        %458 = sbr.rel (%p456) target = $region79
      $region76: #{seq2seq_forward.3} parent=67 // loop_body
        %v463 = vperm.slane %v436, 0
        %v465 = vmul.f32 %v460, %v463
        %vm466 = vcmask 261120
        %v467 = vsel %vm466, %v465, 0.0
        %468 = vadd.xlane.f32.xlu0 %v467
        %v469 = vpop.xlane.xlu0 %468
        %v470 = vadd.f32 %v435, %v469
        %v471 = vmax.f32 %v470, 0.0
        %vm472 = vcmask 64512
        %v473 = vsel %vm472, %v471, -inf
        %474 = vmax.xlane.f32.xlu0 %v473
        %v475 = vpop.xlane.xlu0 %474
        %v476 = vsub.f32 %v471, %v475
        %v477 = vmul.f32 %v476, 1.442695
        %v478 = vpow.pop %v477
        %v479 = vsel %vm472, %v478, 0.0
        %480 = vadd.xlane.f32.xlu0 %v479
        %v481 = vpop.xlane.xlu0 %480
        %v482 = vrcp.pop %v481
        %v483 = vmul.f32 %v478, %v482
        %v484 = vpack.c.bf16 %v483, %v483
        %v486 = vrot.slane %v484, 3
        %vm487 = vcmask 1040384
        %v490 = vsel %vm487, %v484, %v486
        %vm492 = vcmask 1041409
        %v493 = vsel %vm492, %v484, %v486
        %v495 = vrot.slane %v493, 1
        %vm496 = vcmask 1042434
        %v497 = vsel %vm496, %v484, %v486
        %v499 = vrot.slane %v497, 2
        %vm500 = vcmask 1043459
        %v501 = vsel %vm500, %v484, %v486
        %v503 = vrot.slane %v501, 3
        %v504 = vunpack.i.l.s16 %v490
        %v505 = vunpack.i.h.s16 %v490
        %v506 = vunpack.i.l.s16 %v495
        %v507 = vunpack.i.h.s16 %v495
        %v508 = vunpack.i.l.s16 %v499
        %v509 = vunpack.i.h.s16 %v499
        %v510 = vunpack.i.l.s16 %v503
        %v511 = vunpack.i.h.s16 %v503
        %v512 = vpack.i.b16 %v504, %v504
        %v513 = vperm.slane %v512, 0
        %v515 = vsel %vm472, %v513, 0
        %vm517 = vcmask 1043456
        %v519 = vsel %vm517, %v427, 0
        %521 = vmatpush.bf16.msra.mxu0 0
        %522 = vmatpush.bf16.msra.mxu0 0
        %523 = vmatpush.bf16.msra.mxu0 0
        %524 = vmatpush.bf16.msra.mxu0 0
        %525 = vmatpush.bf16.msra.mxu0 0
        %526 = vmatpush.bf16.msra.mxu0 0
        %527 = vmatpush.bf16.msra.mxu0 0
        %528 = vmatpush.bf16.msra.mxu0 %v519
        %529 = vmatmul.bf16.gmra.mxu0 %v515
        %v530 = vpop.f32.mrf.mxu0
        %v531 = vadd.f32 0.0, %v530
        %v532 = vpop.f32.mrf.mxu0
        %533 = vdwg.mxu0
        %v534 = vpack.i.b16 %v505, %v505
        %v535 = vperm.slane %v534, 0
        %v537 = vsel %vm472, %v535, 0
        %v540 = vsel %vm517, %v428, 0
        %542 = vmatpush.bf16.msra.mxu0 0
        %543 = vmatpush.bf16.msra.mxu0 0
        %544 = vmatpush.bf16.msra.mxu0 0
        %545 = vmatpush.bf16.msra.mxu0 0
        %546 = vmatpush.bf16.msra.mxu0 0
        %547 = vmatpush.bf16.msra.mxu0 0
        %548 = vmatpush.bf16.msra.mxu0 0
        %549 = vmatpush.bf16.msra.mxu0 %v540
        %550 = vmatmul.bf16.gmra.mxu0 %v537
        %v551 = vpop.f32.mrf.mxu0
        %v552 = vadd.f32 0.0, %v551
        %v553 = vpop.f32.mrf.mxu0
        %554 = vdwg.mxu0
        %v555 = vpack.i.b16 %v506, %v506
        %v556 = vperm.slane %v555, 0
        %v558 = vsel %vm472, %v556, 0
        %v561 = vsel %vm517, %v429, 0
        %563 = vmatpush.bf16.msra.mxu0 0
        %564 = vmatpush.bf16.msra.mxu0 0
        %565 = vmatpush.bf16.msra.mxu0 0
        %566 = vmatpush.bf16.msra.mxu0 0
        %567 = vmatpush.bf16.msra.mxu0 0
        %568 = vmatpush.bf16.msra.mxu0 0
        %569 = vmatpush.bf16.msra.mxu0 0
        %570 = vmatpush.bf16.msra.mxu0 %v561
        %571 = vmatmul.bf16.gmra.mxu0 %v558
        %v572 = vpop.f32.mrf.mxu0
        %v573 = vadd.f32 0.0, %v572
        %v574 = vpop.f32.mrf.mxu0
        %575 = vdwg.mxu0
        %v576 = vpack.i.b16 %v507, %v507
        %v577 = vperm.slane %v576, 0
        %v579 = vsel %vm472, %v577, 0
        %v582 = vsel %vm517, %v430, 0
        %584 = vmatpush.bf16.msra.mxu0 0
        %585 = vmatpush.bf16.msra.mxu0 0
        %586 = vmatpush.bf16.msra.mxu0 0
        %587 = vmatpush.bf16.msra.mxu0 0
        %588 = vmatpush.bf16.msra.mxu0 0
        %589 = vmatpush.bf16.msra.mxu0 0
        %590 = vmatpush.bf16.msra.mxu0 0
        %591 = vmatpush.bf16.msra.mxu0 %v582
        %592 = vmatmul.bf16.gmra.mxu0 %v579
        %v593 = vpop.f32.mrf.mxu0
        %v594 = vadd.f32 0.0, %v593
        %v595 = vpop.f32.mrf.mxu0
        %596 = vdwg.mxu0
        %v597 = vpack.i.b16 %v508, %v508
        %v598 = vperm.slane %v597, 0
        %v600 = vsel %vm472, %v598, 0
        %v603 = vsel %vm517, %v431, 0
        %605 = vmatpush.bf16.msra.mxu0 0
        %606 = vmatpush.bf16.msra.mxu0 0
        %607 = vmatpush.bf16.msra.mxu0 0
        %608 = vmatpush.bf16.msra.mxu0 0
        %609 = vmatpush.bf16.msra.mxu0 0
        %610 = vmatpush.bf16.msra.mxu0 0
        %611 = vmatpush.bf16.msra.mxu0 0
        %612 = vmatpush.bf16.msra.mxu0 %v603
        %613 = vmatmul.bf16.gmra.mxu0 %v600
        %v614 = vpop.f32.mrf.mxu0
        %v615 = vadd.f32 0.0, %v614
        %v616 = vpop.f32.mrf.mxu0
        %617 = vdwg.mxu0
        %v618 = vpack.i.b16 %v509, %v509
        %v619 = vperm.slane %v618, 0
        %v621 = vsel %vm472, %v619, 0
        %v624 = vsel %vm517, %v432, 0
        %626 = vmatpush.bf16.msra.mxu0 0
        %627 = vmatpush.bf16.msra.mxu0 0
        %628 = vmatpush.bf16.msra.mxu0 0
        %629 = vmatpush.bf16.msra.mxu0 0
        %630 = vmatpush.bf16.msra.mxu0 0
        %631 = vmatpush.bf16.msra.mxu0 0
        %632 = vmatpush.bf16.msra.mxu0 0
        %633 = vmatpush.bf16.msra.mxu0 %v624
        %634 = vmatmul.bf16.gmra.mxu0 %v621
        %v635 = vpop.f32.mrf.mxu0
        %v636 = vadd.f32 0.0, %v635
        %v637 = vpop.f32.mrf.mxu0
        %638 = vdwg.mxu0
        %v639 = vpack.i.b16 %v510, %v510
        %v640 = vperm.slane %v639, 0
        %v642 = vsel %vm472, %v640, 0
        %v645 = vsel %vm517, %v433, 0
        %647 = vmatpush.bf16.msra.mxu0 0
        %648 = vmatpush.bf16.msra.mxu0 0
        %649 = vmatpush.bf16.msra.mxu0 0
        %650 = vmatpush.bf16.msra.mxu0 0
        %651 = vmatpush.bf16.msra.mxu0 0
        %652 = vmatpush.bf16.msra.mxu0 0
        %653 = vmatpush.bf16.msra.mxu0 0
        %654 = vmatpush.bf16.msra.mxu0 %v645
        %655 = vmatmul.bf16.gmra.mxu0 %v642
        %v656 = vpop.f32.mrf.mxu0
        %v657 = vadd.f32 0.0, %v656
        %v658 = vpop.f32.mrf.mxu0
        %659 = vdwg.mxu0
        %v660 = vpack.i.b16 %v511, %v511
        %v661 = vperm.slane %v660, 0
        %v663 = vsel %vm472, %v661, 0
        %v666 = vsel %vm517, %v434, 0
        %668 = vmatpush.bf16.msra.mxu0 0
        %669 = vmatpush.bf16.msra.mxu0 0
        %670 = vmatpush.bf16.msra.mxu0 0
        %671 = vmatpush.bf16.msra.mxu0 0
        %672 = vmatpush.bf16.msra.mxu0 0
        %673 = vmatpush.bf16.msra.mxu0 0
        %674 = vmatpush.bf16.msra.mxu0 0
        %675 = vmatpush.bf16.msra.mxu0 %v666
        %676 = vmatmul.bf16.gmra.mxu0 %v663
        %v677 = vpop.f32.mrf.mxu0
        %v678 = vadd.f32 0.0, %v677
        %v679 = vpop.f32.mrf.mxu0
        %680 = vdwg.mxu0
        %v681 = vpack.c.bf16 %v531, %v531
        %v682 = vpack.c.bf16 %v552, %v552
        %v683 = vpack.c.bf16 %v573, %v573
        %v684 = vpack.c.bf16 %v594, %v594
        %v685 = vpack.c.bf16 %v615, %v615
        %v686 = vpack.c.bf16 %v636, %v636
        %v687 = vpack.c.bf16 %v657, %v657
        %v688 = vpack.c.bf16 %v678, %v678
        %s689 = smul.addr %s455, 4
        %s690 = scalar_lea.vmem %s409, %s689
        %v691 = vld [vmem:[%s690] sm:$0xf]
        %v694 = vunpack.c.l.b16 %v445
        %v695 = vunpack.c.l.b16 %v446
        %v696 = vpack.c.b16 %v695, %v694
        %vm698 = vcmask 130048
        %v700 = vsel %vm698, %v691, 0
        %702 = vmatpush.bf16.msra.mxu0 0
        %703 = vmatpush.bf16.msra.mxu0 0
        %704 = vmatpush.bf16.msra.mxu0 0
        %705 = vmatpush.bf16.msra.mxu0 0
        %706 = vmatpush.bf16.msra.mxu0 0
        %707 = vmatpush.bf16.msra.mxu0 0
        %708 = vmatpush.bf16.msra.mxu0 0
        %709 = vmatpush.bf16.msra.mxu0 %v696
        %710 = vmatmul.bf16.gmra.mxu0 %v700
        %v711 = vpop.f32.mrf.mxu0
        %v712 = vadd.f32 0.0, %v711
        %v713 = vpop.f32.mrf.mxu0
        %714 = vdwg.mxu0
        %v723 = vunpack.c.l.b16 %v681
        %v724 = vunpack.c.l.b16 %v682
        %v725 = vunpack.c.l.b16 %v683
        %v726 = vunpack.c.l.b16 %v684
        %v727 = vunpack.c.l.b16 %v685
        %v728 = vunpack.c.l.b16 %v686
        %v729 = vunpack.c.l.b16 %v687
        %v730 = vunpack.c.l.b16 %v688
        %v731 = vrot.slane %v724, 7
        %v732 = vsel %vm492, %v731, %v723
        %v733 = vrot.slane %v725, 6
        %v734 = vsel %vm496, %v733, %v732
        %v735 = vrot.slane %v726, 5
        %v736 = vsel %vm500, %v735, %v734
        %v737 = vrot.slane %v727, 4
        %vm738 = vcmask 1044484
        %v739 = vsel %vm738, %v737, %v736
        %v740 = vrot.slane %v728, 3
        %vm741 = vcmask 1045509
        %v742 = vsel %vm741, %v740, %v739
        %v743 = vrot.slane %v729, 2
        %vm744 = vcmask 1046534
        %v745 = vsel %vm744, %v743, %v742
        %v746 = vrot.slane %v730, 1
        %vm747 = vcmask 1047559
        %v748 = vsel %vm747, %v746, %v745
        %v749 = vpack.c.b16 %v748, %v748
        %v758 = vunpack.c.l.b16 %v437
        %v759 = vunpack.c.l.b16 %v438
        %v760 = vunpack.c.l.b16 %v439
        %v761 = vunpack.c.l.b16 %v440
        %v762 = vunpack.c.l.b16 %v441
        %v763 = vunpack.c.l.b16 %v442
        %v764 = vunpack.c.l.b16 %v443
        %v765 = vunpack.c.l.b16 %v444
        %v766 = vpack.c.b16 %v759, %v758
        %v767 = vpack.c.b16 %v761, %v760
        %v768 = vpack.c.b16 %v763, %v762
        %v769 = vpack.c.b16 %v765, %v764
        %vm774 = vcmask 523264
        %v776 = vsel %vm774, %v749, 0
        %778 = vmatpush.bf16.msra.mxu0 0
        %779 = vmatpush.bf16.msra.mxu0 0
        %780 = vmatpush.bf16.msra.mxu0 0
        %781 = vmatpush.bf16.msra.mxu0 0
        %782 = vmatpush.bf16.msra.mxu0 %v769
        %783 = vmatpush.bf16.msra.mxu0 %v768
        %784 = vmatpush.bf16.msra.mxu0 %v767
        %785 = vmatpush.bf16.msra.mxu0 %v766
        %786 = vmatmul.bf16.gmra.mxu0 %v776
        %v787 = vpop.f32.mrf.mxu0
        %v788 = vadd.f32 %v712, %v787
        %v789 = vpop.f32.mrf.mxu0
        %790 = vdwg.mxu0
        %v791 = vpack.c.bf16 %v460, %v460
        %v796 = vunpack.c.l.b16 %v447
        %v797 = vunpack.c.l.b16 %v448
        %v798 = vunpack.c.l.b16 %v449
        %v799 = vunpack.c.l.b16 %v450
        %v800 = vpack.c.b16 %v797, %v796
        %v801 = vpack.c.b16 %v799, %v798
        %v805 = vsel %vm466, %v791, 0
        %807 = vmatpush.bf16.msra.mxu0 0
        %808 = vmatpush.bf16.msra.mxu0 0
        %809 = vmatpush.bf16.msra.mxu0 0
        %810 = vmatpush.bf16.msra.mxu0 0
        %811 = vmatpush.bf16.msra.mxu0 0
        %812 = vmatpush.bf16.msra.mxu0 0
        %813 = vmatpush.bf16.msra.mxu0 %v801
        %814 = vmatpush.bf16.msra.mxu0 %v800
        %815 = vmatmul.bf16.gmra.mxu0 %v805
        %v816 = vpop.f32.mrf.mxu0
        %v817 = vadd.f32 0.0, %v816
        %v818 = vpop.f32.mrf.mxu0
        %819 = vdwg.mxu0
        %v820 = vadd.f32 %v788, %v817
        %v822 = vperm.slane %v451, 0
        %v824 = vadd.f32 %v820, %v822
        %v825 = vxor.u32 %v824, 2147483648
        %v826 = vmul.f32 %v825, 1.442695
        %v827 = vpow.pop %v826
        %v828 = vadd.f32 %v827, 1.0
        %v829 = vrcp.pop %v828
        %v830 = vmul.f32 %v828, %v829
        %v831 = vsub.f32 1.0, %v830
        %v832 = vmul.f32 %v829, %v831
        %v833 = vadd.f32 %v829, %v832
        %vm834 = vweird.f32 %v828
        %vm835 = vweird.f32 %v829
        %vm836 = vmor %vm834, %vm835
        %v837 = vsel %vm836, %v829, %v833
        %v838 = vand.u32 2147483647, %v828
        %vm839 = vcmp.eq.f32.partialorder %v838, 8.507059e+37
        %v840 = vand.u32 %v828, 2147483648
        %v841 = vor.u32 1.1754944e-38, %v840
        %v842 = vsel %vm839, %v841, %v837
        %v843 = vmul.f32 1.0, %v842
        %v844 = vtanh.pop %v824
        %846 = vrot.lane.b32.xlu0 %v461, 32
        %v847 = vpop.permute.xlu0 %846
        %v849 = vmul.f32 %v843, %v847
        %851 = vrot.lane.b32.xlu0 %v844, 64
        %v852 = vpop.permute.xlu0 %851
        %v854 = vmul.f32 %v843, %v852
        %856 = vrot.lane.b32.xlu0 %v854, 32
        %v857 = vpop.permute.xlu0 %856
        %v859 = vadd.f32 %v849, %v857
        %v860 = vtanh.pop %v859
        %862 = vrot.lane.b32.xlu0 %v860, 64
        %v863 = vpop.permute.xlu0 %862
        %v865 = vmul.f32 %v843, %v863
        %v866 = vpack.c.bf16 %v865, %v865
        %868 = vrot.lane.b32.xlu0 %v866, 32
        %v869 = vpop.permute.xlu0 %868
        %s871 = smul.addr %s455, 4
        %s872 = scalar_lea.vmem [#allocation4], %s871
        %vm873 = vcmask 257024
        %874 = vst.msk [vmem:[%s872] sm:$0xf] %vm873, %v869
        %876 = vrot.lane.b32.xlu0 %v865, 32
        %v877 = vpop.permute.xlu0 %876
        %880 = vrot.lane.b32.xlu0 %v859, 96
        %v881 = vpop.permute.xlu0 %880
      $region77: #{seq2seq_forward.3} parent=67 // loop_footer
        %s459 = sadd.s32 1, %s455
      $region78: #{seq2seq_forward.3} parent=67 // loop_footer_branch
        %454 = sbr.rel target = $region74
      $region79: #{seq2seq_forward.3} parent=67 // loop_exit
        _
      %vm883 = vcmask 261120
      %884 = vst.msk [vmem:[#allocation2] sm:$0xff] %vm883, %v460
      %885 = vst.msk [vmem:[#allocation3] sm:$0xff] %vm883, %v461
      %v886 = vld [vmem:[#allocation4] sm:$0xf]
      %v887 = vld [vmem:[#allocation4 + $0x4] sm:$0xf]
      %v888 = vld [vmem:[#allocation4 + $0x8] sm:$0xf]
      %v889 = vld [vmem:[#allocation4 + $0xc] sm:$0xf]
      %v890 = vld [vmem:[%s8] sm:$0xf]
      %v891 = vld [vmem:[%s8 + $0x4] sm:$0xf]
      %v892 = vld [vmem:[%s8 + $0x8] sm:$0xf]
      %v893 = vld [vmem:[%s8 + $0xc] sm:$0xf]
      %v894 = vld [vmem:[%s9] sm:$0x1]
      %v896 = vperm.slane %v894, 0
      %v902 = vunpack.c.l.b16 %v886
      %v903 = vunpack.c.l.b16 %v887
      %v904 = vunpack.c.l.b16 %v888
      %v905 = vunpack.c.l.b16 %v889
      %v906 = vpack.c.b16 %v903, %v902
      %v907 = vpack.c.b16 %v905, %v904
      %v912 = vunpack.c.l.b16 %v890
      %v913 = vunpack.c.l.b16 %v891
      %v914 = vunpack.c.l.b16 %v892
      %v915 = vunpack.c.l.b16 %v893
      %v916 = vpack.c.b16 %v913, %v912
      %v917 = vpack.c.b16 %v915, %v914
      %v921 = vsel %vm883, %v906, 0
      %v924 = vsel %vm883, %v907, 0
      %926 = vmatpush.bf16.msra.mxu0 0
      %927 = vmatpush.bf16.msra.mxu0 0
      %928 = vmatpush.bf16.msra.mxu0 0
      %929 = vmatpush.bf16.msra.mxu0 0
      %930 = vmatpush.bf16.msra.mxu0 0
      %931 = vmatpush.bf16.msra.mxu0 0
      %932 = vmatpush.bf16.msra.mxu0 %v917
      %933 = vmatpush.bf16.msra.mxu0 %v916
      %934 = vmatmul.bf16.gmra.mxu0 %v921
      %v935 = vpop.f32.mrf.mxu0
      %v936 = vadd.f32 %v896, %v935
      %v937 = vpop.f32.mrf.mxu0
      %v938 = vadd.f32 %v896, %v937
      %939 = vmatmul.bf16.gmra.mxu0 %v924
      %v940 = vpop.f32.mrf.mxu0
      %v941 = vadd.f32 %v896, %v940
      %v942 = vpop.f32.mrf.mxu0
      %v943 = vadd.f32 %v896, %v942
      %944 = vdwg.mxu0
      %v945 = vpack.c.bf16 %v936, %v936
      %v946 = vpack.c.bf16 %v938, %v938
      %v947 = vpack.c.bf16 %v941, %v941
      %v948 = vpack.c.bf16 %v943, %v943
      %949 = vst [vmem:[%s415] sm:$0xf] %v945
      %950 = vst [vmem:[%s415 + $0x4] sm:$0xf] %v946
      %951 = vst [vmem:[%s415 + $0x8] sm:$0xf] %v947
      %952 = vst [vmem:[%s415 + $0xc] sm:$0xf] %v948
      %s953 = smul.u32 4, %s23
      %p954 = scmp.lt.s32.totalorder %s953, 7
      %s955 = scalar_select %p954, %s953, 7
      %s956 = smul.addr %s955, 4
      %s957 = scalar_lea.vmem %s12, %s956
      // Predicated region
      $region80: #{seq2seq_forward.3} parent=67 // pred_check
        %p958 = pneg %p298
      $region81: #{seq2seq_forward.3} parent=67 // pred_check_branch
        %960 = sbr.rel (%p958) target = $region83
      $region82: #{seq2seq_forward.3} parent=67 // pred_region
        %s961 = smul.u32 4, %s23
      $region83: #{seq2seq_forward.3} parent=67 // pred_fallthru
        _
    $region68: #{seq2seq_forward.3} parent=5 // pred_fallthru
      _
    %p962 = scmp.le.s32.totalorder 2, %s18
    // Predicated region
    $region84: #{seq2seq_forward.3} parent=5 // pred_check
      %p963 = pneg %p962
    $region85: #{seq2seq_forward.3} parent=5 // pred_check_branch
      %965 = sbr.rel (%p963) target = $region87
    $region86: #{seq2seq_forward.3} parent=5 // pred_region
      %s966 = ssub.s32 %s18, 2
      // Predicated region
      $region88: #{seq2seq_forward.3} parent=86 // pred_check
        %p967 = pneg %p304
      $region89: #{seq2seq_forward.3} parent=86 // pred_check_branch
        %969 = sbr.rel (%p967) target = $region91
      $region90: #{seq2seq_forward.3} parent=86 // pred_region
        %s970 = smul.u32 4, %s24
        %p971 = scmp.lt.s32.totalorder %s970, 7
        %s972 = scalar_select %p971, %s970, 7
        %s973 = smul.addr %s972, 4
        %s974 = scalar_lea.vmem %s12, %s973
      $region91: #{seq2seq_forward.3} parent=86 // pred_fallthru
        _
    $region87: #{seq2seq_forward.3} parent=5 // pred_fallthru
      _
  $region6: #{seq2seq_forward.3} parent=0 // loop_footer
    %s22 = sadd.s32 1, %s18
  $region7: #{seq2seq_forward.3} parent=0 // loop_footer_branch
    %17 = sbr.rel target = $region3
  $region8: #{seq2seq_forward.3} parent=0 // loop_exit
    _

</llo_original>
